<compile_context>
chip_gen: v7x
topology: tpu7x:2x2x1
jax: 0.10.0
libtpu: 0.0.40
codegen_flags: <defaults>
</compile_context>

<pallas_src>
import math

import jax
import jax.numpy as jnp
from jax.experimental import pallas as pl
from jax.experimental.pallas import tpu as pltpu


# ----------------------------- kernel bodies -----------------------------

def _layer_norm(x, gamma, beta, eps=1e-5):
    # x: [S, D] f32; gamma/beta: [1, D] f32.  Biased variance, like PyTorch.
    mu = jnp.mean(x, axis=-1, keepdims=True)
    xc = x - mu
    var = jnp.mean(xc * xc, axis=-1, keepdims=True)
    return xc * jax.lax.rsqrt(var + eps) * gamma + beta


def make_encoder_layer_kernel(n_heads: int, with_final_ln: bool):
    """Build a fused encoder-layer kernel (optionally fusing the final LN)."""

    def kernel(*refs):
        if with_final_ln:
            (x_ref,
             wq_ref, bq_ref, wk_ref, bk_ref, wv_ref, bv_ref, wo_ref, bo_ref,
             g1_ref, be1_ref,
             w1_ref, b1_ref, w2_ref, b2_ref,
             g2_ref, be2_ref,
             gf_ref, bf_ref,
             o_ref) = refs
        else:
            (x_ref,
             wq_ref, bq_ref, wk_ref, bk_ref, wv_ref, bv_ref, wo_ref, bo_ref,
             g1_ref, be1_ref,
             w1_ref, b1_ref, w2_ref, b2_ref,
             g2_ref, be2_ref,
             o_ref) = refs
            gf_ref = bf_ref = None

        x = x_ref[...].astype(jnp.float32)          # [S, D]
        S, D = x.shape
        H = n_heads
        dh = D // H
        scale = 1.0 / math.sqrt(dh)

        # --- multi-head self-attention (all heads batched on a leading axis) ---
        xb = x.astype(jnp.bfloat16)                  # bf16 MXU operands
        xh = jnp.broadcast_to(xb, (H, S, D))         # hoisted once, reused 3x

        # projections: [H,S,D] x [H,D,dh] -> [H,S,dh]   (f32 accumulate)
        qh = jnp.einsum('hsd,hdf->hsf', xh, wq_ref[...],
                        preferred_element_type=jnp.float32)
        kh = jnp.einsum('hsd,hdf->hsf', xh, wk_ref[...],
                        preferred_element_type=jnp.float32)
        vh = jnp.einsum('hsd,hdf->hsf', xh, wv_ref[...],
                        preferred_element_type=jnp.float32)
        qh = (qh + bq_ref[...]) * scale              # fold 1/sqrt(dh) into q
        kh = kh + bk_ref[...]
        vh = vh + bv_ref[...]

        # scores: [H,S,dh] x [H,S,dh] -> [H,S,S]
        s = jnp.einsum('hqf,hkf->hqk',
                       qh.astype(jnp.bfloat16), kh.astype(jnp.bfloat16),
                       preferred_element_type=jnp.float32)

        # softmax (f32, max-subtracted, approx reciprocal on the EUP)
        s = s - jnp.max(s, axis=-1, keepdims=True)
        p = jnp.exp(s)
        p = p * pl.reciprocal(jnp.sum(p, axis=-1, keepdims=True), approx=True)

        # context: [H,S,S] x [H,S,dh] -> [H,S,dh]
        ctx = jnp.einsum('hqk,hkf->hqf',
                         p.astype(jnp.bfloat16), vh.astype(jnp.bfloat16),
                         preferred_element_type=jnp.float32)

        # output projection: sum_h ctx_h @ Wo_h  ([H,dh,D]) -> [S,D]
        proj = jnp.einsum('hsf,hfd->hsd',
                          ctx.astype(jnp.bfloat16), wo_ref[...],
                          preferred_element_type=jnp.float32)
        attn = jnp.sum(proj, axis=0) + bo_ref[...]   # [S, D]

        # --- residual + LayerNorm 1 ---
        h1 = _layer_norm(x + attn, g1_ref[...], be1_ref[...])

        # --- position-wise feed-forward ---
        ff = jnp.dot(h1.astype(jnp.bfloat16), w1_ref[...],
                     preferred_element_type=jnp.float32) + b1_ref[...]
        ff = jnp.maximum(ff, 0.0)
        ff = jnp.dot(ff.astype(jnp.bfloat16), w2_ref[...],
                     preferred_element_type=jnp.float32) + b2_ref[...]

        # --- residual + LayerNorm 2 (+ fused final LayerNorm on last layer) ---
        y = _layer_norm(h1 + ff, g2_ref[...], be2_ref[...])
        if with_final_ln:
            y = _layer_norm(y, gf_ref[...], bf_ref[...])
        o_ref[...] = y.astype(o_ref.dtype)

    return kernel


# ----------------------------- wrappers -----------------------------

def _rep_spec(arr):
    """BlockSpec for a parameter replicated across the batch grid."""
    nd = arr.ndim
    return pl.BlockSpec(arr.shape, lambda b, _nd=nd: (0,) * _nd)


def encoder_layer_call(x, p, *, n_heads, final_norm=None):
    B, S, D = x.shape
    assert D % n_heads == 0, "d_model must be divisible by n_heads"

    inputs = [x,
              p["wq"], p["bq"], p["wk"], p["bk"], p["wv"], p["bv"],
              p["wo"], p["bo"],
              p["ln1_g"], p["ln1_b"],
              p["w1"], p["b1"], p["w2"], p["b2"],
              p["ln2_g"], p["ln2_b"]]
    if final_norm is not None:
        inputs += [final_norm[0], final_norm[1]]

    x_spec = pl.BlockSpec((None, S, D), lambda b: (b, 0, 0))
    in_specs = [x_spec] + [_rep_spec(a) for a in inputs[1:]]
    out_spec = pl.BlockSpec((None, S, D), lambda b: (b, 0, 0))

    kernel = make_encoder_layer_kernel(n_heads, final_norm is not None)
    return pl.pallas_call(
        kernel,
        out_shape=jax.ShapeDtypeStruct((B, S, D), x.dtype),
        grid=(B,),
        in_specs=in_specs,
        out_specs=out_spec,
        compiler_params=pltpu.CompilerParams(
            dimension_semantics=("parallel",),
            vmem_limit_bytes=64 * 1024 * 1024,
        ),
    )(*inputs)


def encoder_forward(x, kparams, *, n_heads):
    layers = kparams["layers"]
    assert len(layers) >= 1
    last = len(layers) - 1
    for i, lp in enumerate(layers):
        fn = (kparams["norm_g"], kparams["norm_b"]) if i == last else None
        x = encoder_layer_call(x, lp, n_heads=n_heads, final_norm=fn)
    return x


# ----------------------------- parameter init / prep -----------------------------

def _bf16_representable(w):
    # Round once so kernel (bf16 storage) and reference (f32) use identical weights.
    return w.astype(jnp.bfloat16).astype(jnp.float32)


def init_params(key, d_model, d_ff, n_layers):
    """Canonical f32 params (linear weights stored [in, out])."""
    layers = []
    scale = 0.05
    for _ in range(n_layers):
        keys = jax.random.split(key, 7)
        key = keys[0]
        lp = {
            "wq": _bf16_representable(scale * jax.random.normal(keys[1], (d_model, d_model), jnp.float32)),
            "bq": jnp.zeros((d_model,), jnp.float32),
            "wk": _bf16_representable(scale * jax.random.normal(keys[2], (d_model, d_model), jnp.float32)),
            "bk": jnp.zeros((d_model,), jnp.float32),
            "wv": _bf16_representable(scale * jax.random.normal(keys[3], (d_model, d_model), jnp.float32)),
            "bv": jnp.zeros((d_model,), jnp.float32),
            "wo": _bf16_representable(scale * jax.random.normal(keys[4], (d_model, d_model), jnp.float32)),
            "bo": jnp.zeros((d_model,), jnp.float32),
            "ln1_g": jnp.ones((d_model,), jnp.float32),
            "ln1_b": jnp.zeros((d_model,), jnp.float32),
            "w1": _bf16_representable(scale * jax.random.normal(keys[5], (d_model, d_ff), jnp.float32)),
            "b1": jnp.zeros((d_ff,), jnp.float32),
            "w2": _bf16_representable(scale * jax.random.normal(keys[6], (d_ff, d_model), jnp.float32)),
            "b2": jnp.zeros((d_model,), jnp.float32),
            "ln2_g": jnp.ones((d_model,), jnp.float32),
            "ln2_b": jnp.zeros((d_model,), jnp.float32),
        }
        layers.append(lp)
    return {
        "layers": layers,
        "norm_g": jnp.ones((d_model,), jnp.float32),
        "norm_b": jnp.zeros((d_model,), jnp.float32),
    }


def prepare_kernel_params(params, n_heads):
    """Reshape/cast canonical params into the kernel layout:
       * attention weights pre-split per head ([H,D,dh] / [H,dh,D]), bf16
       * FFN weights bf16
       * biases / LN params as 2-D rows, f32
    """

    def prep_layer(lp):
        D = lp["wq"].shape[0]
        d_ff = lp["w1"].shape[1]
        dh = D // n_heads

        def qkv_w(w):   # [D, H*dh] -> [H, D, dh]
            return jnp.transpose(w.reshape(D, n_heads, dh), (1, 0, 2)).astype(jnp.bfloat16)

        def qkv_b(b):   # [H*dh] -> [H, 1, dh]
            return b.reshape(n_heads, 1, dh).astype(jnp.float32)

        return {
            "wq": qkv_w(lp["wq"]), "bq": qkv_b(lp["bq"]),
            "wk": qkv_w(lp["wk"]), "bk": qkv_b(lp["bk"]),
            "wv": qkv_w(lp["wv"]), "bv": qkv_b(lp["bv"]),
            "wo": lp["wo"].reshape(n_heads, dh, D).astype(jnp.bfloat16),
            "bo": lp["bo"].reshape(1, D).astype(jnp.float32),
            "ln1_g": lp["ln1_g"].reshape(1, D).astype(jnp.float32),
            "ln1_b": lp["ln1_b"].reshape(1, D).astype(jnp.float32),
            "w1": lp["w1"].astype(jnp.bfloat16),
            "b1": lp["b1"].reshape(1, d_ff).astype(jnp.float32),
            "w2": lp["w2"].astype(jnp.bfloat16),
            "b2": lp["b2"].reshape(1, D).astype(jnp.float32),
            "ln2_g": lp["ln2_g"].reshape(1, D).astype(jnp.float32),
            "ln2_b": lp["ln2_b"].reshape(1, D).astype(jnp.float32),
        }

    D = params["norm_g"].shape[0]
    return {
        "layers": [prep_layer(lp) for lp in params["layers"]],
        "norm_g": params["norm_g"].reshape(1, D).astype(jnp.float32),
        "norm_b": params["norm_b"].reshape(1, D).astype(jnp.float32),
    }


# ----------------------------- reference (plain JAX, f32) -----------------------------

def _ref_forward(x, params, n_heads):
    def ln(y, g, b, eps=1e-5):
        mu = y.mean(-1, keepdims=True)
        var = ((y - mu) ** 2).mean(-1, keepdims=True)
        return (y - mu) / jnp.sqrt(var + eps) * g + b

    B, S, D = x.shape
    dh = D // n_heads
    for p in params["layers"]:
        q = x @ p["wq"] + p["bq"]
        k = x @ p["wk"] + p["bk"]
        v = x @ p["wv"] + p["bv"]
        qh = q.reshape(B, S, n_heads, dh).transpose(0, 2, 1, 3)
        kh = k.reshape(B, S, n_heads, dh).transpose(0, 2, 1, 3)
        vh = v.reshape(B, S, n_heads, dh).transpose(0, 2, 1, 3)
        s = jnp.einsum("bhqd,bhkd->bhqk", qh, kh) / math.sqrt(dh)
        a = jax.nn.softmax(s, axis=-1)
        o = jnp.einsum("bhqk,bhkd->bhqd", a, vh).transpose(0, 2, 1, 3).reshape(B, S, D)
        o = o @ p["wo"] + p["bo"]
        x = ln(x + o, p["ln1_g"], p["ln1_b"])
        ff = jnp.maximum(x @ p["w1"] + p["b1"], 0.0) @ p["w2"] + p["b2"]
        x = ln(x + ff, p["ln2_g"], p["ln2_b"])
    return ln(x, params["norm_g"], params["norm_b"])


# ----------------------------- main -----------------------------

if __name__ == "__main__":
    B, S = 2, 8
    d_model, d_ff, n_heads, n_layers = 32, 64, 4, 2

    key = jax.random.PRNGKey(0)
    kx, kp = jax.random.split(key)
    x = jax.random.normal(kx, (B, S, d_model), jnp.float32)

    params = init_params(kp, d_model, d_ff, n_layers)
    kparams = prepare_kernel_params(params, n_heads)

    out = encoder_forward(x, kparams, n_heads=n_heads)
    out = jax.block_until_ready(out)

    ref = _ref_forward(x, params, n_heads)
    assert out.shape == (B, S, d_model)
    max_err = float(jnp.max(jnp.abs(out - ref)))
    # bf16 matmul operands + approx reciprocal => slightly looser tolerance than pure f32.
    assert jnp.allclose(out, ref, atol=2e-2, rtol=2e-2), (
        f"mismatch vs JAX reference (max abs err {max_err:.3e})")

    print("KERNEL_OK")
</pallas_src>

<mosaic_0001>
module attributes {stable_mosaic.version = 11 : i64} {
  func.func @kernel(%arg0: i32, %arg1: memref<1x8x32xf32, #tpu.memory_space<vmem>>, %arg2: memref<4x32x8xbf16, #tpu.memory_space<vmem>>, %arg3: memref<4x1x8xf32, #tpu.memory_space<vmem>>, %arg4: memref<4x32x8xbf16, #tpu.memory_space<vmem>>, %arg5: memref<4x1x8xf32, #tpu.memory_space<vmem>>, %arg6: memref<4x32x8xbf16, #tpu.memory_space<vmem>>, %arg7: memref<4x1x8xf32, #tpu.memory_space<vmem>>, %arg8: memref<4x8x32xbf16, #tpu.memory_space<vmem>>, %arg9: memref<1x32xf32, #tpu.memory_space<vmem>>, %arg10: memref<1x32xf32, #tpu.memory_space<vmem>>, %arg11: memref<1x32xf32, #tpu.memory_space<vmem>>, %arg12: memref<32x64xbf16, #tpu.memory_space<vmem>>, %arg13: memref<1x64xf32, #tpu.memory_space<vmem>>, %arg14: memref<64x32xbf16, #tpu.memory_space<vmem>>, %arg15: memref<1x32xf32, #tpu.memory_space<vmem>>, %arg16: memref<1x32xf32, #tpu.memory_space<vmem>>, %arg17: memref<1x32xf32, #tpu.memory_space<vmem>>, %arg18: memref<1x8x32xf32, #tpu.memory_space<vmem>>) attributes {dimension_semantics = [#tpu.dimension_semantics<parallel>], iteration_bounds = array<i64: 2>, scalar_prefetch = 0 : i64, scratch_operands = 0 : i64, tpu.core_type = #tpu.core_type<tc>, window_params = [{transform_indices = @transform_0, window_bounds = array<i64: 1, 8, 32>}, {pipeline_mode = #tpu.pipeline_mode<synchronous>, transform_indices = @transform_1, window_bounds = array<i64: 4, 32, 8>}, {pipeline_mode = #tpu.pipeline_mode<synchronous>, transform_indices = @transform_2, window_bounds = array<i64: 4, 1, 8>}, {pipeline_mode = #tpu.pipeline_mode<synchronous>, transform_indices = @transform_3, window_bounds = array<i64: 4, 32, 8>}, {pipeline_mode = #tpu.pipeline_mode<synchronous>, transform_indices = @transform_4, window_bounds = array<i64: 4, 1, 8>}, {pipeline_mode = #tpu.pipeline_mode<synchronous>, transform_indices = @transform_5, window_bounds = array<i64: 4, 32, 8>}, {pipeline_mode = #tpu.pipeline_mode<synchronous>, transform_indices = @transform_6, window_bounds = array<i64: 4, 1, 8>}, {pipeline_mode = #tpu.pipeline_mode<synchronous>, transform_indices = @transform_7, window_bounds = array<i64: 4, 8, 32>}, {pipeline_mode = #tpu.pipeline_mode<synchronous>, transform_indices = @transform_8, window_bounds = array<i64: 1, 32>}, {pipeline_mode = #tpu.pipeline_mode<synchronous>, transform_indices = @transform_9, window_bounds = array<i64: 1, 32>}, {pipeline_mode = #tpu.pipeline_mode<synchronous>, transform_indices = @transform_10, window_bounds = array<i64: 1, 32>}, {pipeline_mode = #tpu.pipeline_mode<synchronous>, transform_indices = @transform_11, window_bounds = array<i64: 32, 64>}, {pipeline_mode = #tpu.pipeline_mode<synchronous>, transform_indices = @transform_12, window_bounds = array<i64: 1, 64>}, {pipeline_mode = #tpu.pipeline_mode<synchronous>, transform_indices = @transform_13, window_bounds = array<i64: 64, 32>}, {pipeline_mode = #tpu.pipeline_mode<synchronous>, transform_indices = @transform_14, window_bounds = array<i64: 1, 32>}, {pipeline_mode = #tpu.pipeline_mode<synchronous>, transform_indices = @transform_15, window_bounds = array<i64: 1, 32>}, {pipeline_mode = #tpu.pipeline_mode<synchronous>, transform_indices = @transform_16, window_bounds = array<i64: 1, 32>}, {transform_indices = @transform_17, window_bounds = array<i64: 1, 8, 32>}]} {
    %c0 = arith.constant 0 : index
    %c0_0 = arith.constant 0 : index
    %c0_1 = arith.constant 0 : index
    %0 = vector.load %arg1[%c0, %c0_0, %c0_1] : memref<1x8x32xf32, #tpu.memory_space<vmem>>, vector<1x8x32xf32>
    %1 = vector.shape_cast %0 : vector<1x8x32xf32> to vector<8x32xf32>
    %2 = arith.truncf %1 : vector<8x32xf32> to vector<8x32xbf16>
    %3 = vector.shape_cast %2 : vector<8x32xbf16> to vector<1x8x32xbf16>
    %4 = vector.broadcast %3 : vector<1x8x32xbf16> to vector<4x8x32xbf16>
    %c0_2 = arith.constant 0 : index
    %c0_3 = arith.constant 0 : index
    %c0_4 = arith.constant 0 : index
    %5 = vector.load %arg2[%c0_2, %c0_3, %c0_4] : memref<4x32x8xbf16, #tpu.memory_space<vmem>>, vector<4x32x8xbf16>
    "tpu.trace_start"() <{level = 10 : i32, message = "hsd,hdf->hsf"}> : () -> ()
    %cst = arith.constant dense<0.000000e+00> : vector<4x8x8xf32>
    %6 = tpu.matmul %4, %5, %cst {dimension_numbers = #tpu.dot_dimension_numbers<[2], [1], [1], [2], [0, 0, 0, 1, 1, 2], [0], [0]>} : vector<4x8x32xbf16>, vector<4x32x8xbf16>, vector<4x8x8xf32> -> vector<4x8x8xf32>
    "tpu.trace_stop"() : () -> ()
    %c0_5 = arith.constant 0 : index
    %c0_6 = arith.constant 0 : index
    %c0_7 = arith.constant 0 : index
    %7 = vector.load %arg4[%c0_5, %c0_6, %c0_7] : memref<4x32x8xbf16, #tpu.memory_space<vmem>>, vector<4x32x8xbf16>
    "tpu.trace_start"() <{level = 10 : i32, message = "hsd,hdf->hsf"}> : () -> ()
    %cst_8 = arith.constant dense<0.000000e+00> : vector<4x8x8xf32>
    %8 = tpu.matmul %4, %7, %cst_8 {dimension_numbers = #tpu.dot_dimension_numbers<[2], [1], [1], [2], [0, 0, 0, 1, 1, 2], [0], [0]>} : vector<4x8x32xbf16>, vector<4x32x8xbf16>, vector<4x8x8xf32> -> vector<4x8x8xf32>
    "tpu.trace_stop"() : () -> ()
    %c0_9 = arith.constant 0 : index
    %c0_10 = arith.constant 0 : index
    %c0_11 = arith.constant 0 : index
    %9 = vector.load %arg6[%c0_9, %c0_10, %c0_11] : memref<4x32x8xbf16, #tpu.memory_space<vmem>>, vector<4x32x8xbf16>
    "tpu.trace_start"() <{level = 10 : i32, message = "hsd,hdf->hsf"}> : () -> ()
    %cst_12 = arith.constant dense<0.000000e+00> : vector<4x8x8xf32>
    %10 = tpu.matmul %4, %9, %cst_12 {dimension_numbers = #tpu.dot_dimension_numbers<[2], [1], [1], [2], [0, 0, 0, 1, 1, 2], [0], [0]>} : vector<4x8x32xbf16>, vector<4x32x8xbf16>, vector<4x8x8xf32> -> vector<4x8x8xf32>
    "tpu.trace_stop"() : () -> ()
    %c0_13 = arith.constant 0 : index
    %c0_14 = arith.constant 0 : index
    %c0_15 = arith.constant 0 : index
    %11 = vector.load %arg3[%c0_13, %c0_14, %c0_15] : memref<4x1x8xf32, #tpu.memory_space<vmem>>, vector<4x1x8xf32>
    %12 = vector.broadcast %11 : vector<4x1x8xf32> to vector<4x8x8xf32>
    %13 = arith.addf %6, %12 : vector<4x8x8xf32>
    %cst_16 = arith.constant 0.353553385 : f32
    %14 = vector.broadcast %cst_16 : f32 to vector<4x8x8xf32>
    %15 = arith.mulf %13, %14 : vector<4x8x8xf32>
    %c0_17 = arith.constant 0 : index
    %c0_18 = arith.constant 0 : index
    %c0_19 = arith.constant 0 : index
    %16 = vector.load %arg5[%c0_17, %c0_18, %c0_19] : memref<4x1x8xf32, #tpu.memory_space<vmem>>, vector<4x1x8xf32>
    %17 = vector.broadcast %16 : vector<4x1x8xf32> to vector<4x8x8xf32>
    %18 = arith.addf %8, %17 : vector<4x8x8xf32>
    %c0_20 = arith.constant 0 : index
    %c0_21 = arith.constant 0 : index
    %c0_22 = arith.constant 0 : index
    %19 = vector.load %arg7[%c0_20, %c0_21, %c0_22] : memref<4x1x8xf32, #tpu.memory_space<vmem>>, vector<4x1x8xf32>
    %20 = vector.broadcast %19 : vector<4x1x8xf32> to vector<4x8x8xf32>
    %21 = arith.addf %10, %20 : vector<4x8x8xf32>
    %22 = arith.truncf %15 : vector<4x8x8xf32> to vector<4x8x8xbf16>
    %23 = arith.truncf %18 : vector<4x8x8xf32> to vector<4x8x8xbf16>
    "tpu.trace_start"() <{level = 10 : i32, message = "hqf,hkf->hqk"}> : () -> ()
    %cst_23 = arith.constant dense<0.000000e+00> : vector<4x8x8xf32>
    %24 = tpu.matmul %22, %23, %cst_23 {dimension_numbers = #tpu.dot_dimension_numbers<[2], [2], [1], [1], [0, 0, 0, 1, 1, 1], [0], [0]>} : vector<4x8x8xbf16>, vector<4x8x8xbf16>, vector<4x8x8xf32> -> vector<4x8x8xf32>
    "tpu.trace_stop"() : () -> ()
    %cst_24 = arith.constant dense<0xFF800000> : vector<4x8xf32>
    %25 = vector.multi_reduction <maximumf>, %24, %cst_24 [2] : vector<4x8x8xf32> to vector<4x8xf32>
    %26 = vector.shape_cast %25 : vector<4x8xf32> to vector<4x8x1xf32>
    %27 = vector.broadcast %26 : vector<4x8x1xf32> to vector<4x8x8xf32>
    %28 = arith.subf %24, %27 : vector<4x8x8xf32>
    %29 = math.exp %28 : vector<4x8x8xf32>
    %cst_25 = arith.constant dense<0.000000e+00> : vector<4x8xf32>
    %30 = vector.multi_reduction <add>, %29, %cst_25 [2] : vector<4x8x8xf32> to vector<4x8xf32>
    %31 = vector.shape_cast %30 : vector<4x8xf32> to vector<4x8x1xf32>
    %32 = tpu.reciprocal %31 {approx = true} : vector<4x8x1xf32> -> vector<4x8x1xf32>
    %33 = vector.broadcast %32 : vector<4x8x1xf32> to vector<4x8x8xf32>
    %34 = arith.mulf %29, %33 : vector<4x8x8xf32>
    %35 = arith.truncf %34 : vector<4x8x8xf32> to vector<4x8x8xbf16>
    %36 = arith.truncf %21 : vector<4x8x8xf32> to vector<4x8x8xbf16>
    "tpu.trace_start"() <{level = 10 : i32, message = "hqk,hkf->hqf"}> : () -> ()
    %cst_26 = arith.constant dense<0.000000e+00> : vector<4x8x8xf32>
    %37 = tpu.matmul %35, %36, %cst_26 {dimension_numbers = #tpu.dot_dimension_numbers<[2], [1], [1], [2], [0, 0, 0, 1, 1, 2], [0], [0]>} : vector<4x8x8xbf16>, vector<4x8x8xbf16>, vector<4x8x8xf32> -> vector<4x8x8xf32>
    "tpu.trace_stop"() : () -> ()
    %38 = arith.truncf %37 : vector<4x8x8xf32> to vector<4x8x8xbf16>
    %c0_27 = arith.constant 0 : index
    %c0_28 = arith.constant 0 : index
    %c0_29 = arith.constant 0 : index
    %39 = vector.load %arg8[%c0_27, %c0_28, %c0_29] : memref<4x8x32xbf16, #tpu.memory_space<vmem>>, vector<4x8x32xbf16>
    "tpu.trace_start"() <{level = 10 : i32, message = "hsf,hfd->hsd"}> : () -> ()
    %cst_30 = arith.constant dense<0.000000e+00> : vector<4x8x32xf32>
    %40 = tpu.matmul %38, %39, %cst_30 {dimension_numbers = #tpu.dot_dimension_numbers<[2], [1], [1], [2], [0, 0, 0, 1, 1, 2], [0], [0]>} : vector<4x8x8xbf16>, vector<4x8x32xbf16>, vector<4x8x32xf32> -> vector<4x8x32xf32>
    "tpu.trace_stop"() : () -> ()
    %cst_31 = arith.constant dense<0.000000e+00> : vector<8x32xf32>
    %41 = vector.multi_reduction <add>, %40, %cst_31 [0] : vector<4x8x32xf32> to vector<8x32xf32>
    %c0_32 = arith.constant 0 : index
    %c0_33 = arith.constant 0 : index
    %42 = vector.load %arg9[%c0_32, %c0_33] : memref<1x32xf32, #tpu.memory_space<vmem>>, vector<1x32xf32>
    %43 = vector.broadcast %42 : vector<1x32xf32> to vector<8x32xf32>
    %44 = arith.addf %41, %43 : vector<8x32xf32>
    %45 = arith.addf %1, %44 : vector<8x32xf32>
    %c0_34 = arith.constant 0 : index
    %c0_35 = arith.constant 0 : index
    %46 = vector.load %arg10[%c0_34, %c0_35] : memref<1x32xf32, #tpu.memory_space<vmem>>, vector<1x32xf32>
    %c0_36 = arith.constant 0 : index
    %c0_37 = arith.constant 0 : index
    %47 = vector.load %arg11[%c0_36, %c0_37] : memref<1x32xf32, #tpu.memory_space<vmem>>, vector<1x32xf32>
    %cst_38 = arith.constant dense<0.000000e+00> : vector<8xf32>
    %48 = vector.multi_reduction <add>, %45, %cst_38 [1] : vector<8x32xf32> to vector<8xf32>
    %49 = vector.shape_cast %48 : vector<8xf32> to vector<8x1xf32>
    %cst_39 = arith.constant 3.200000e+01 : f32
    %50 = vector.broadcast %cst_39 : f32 to vector<8x1xf32>
    %51 = arith.divf %49, %50 : vector<8x1xf32>
    %52 = vector.broadcast %51 : vector<8x1xf32> to vector<8x32xf32>
    %53 = arith.subf %45, %52 : vector<8x32xf32>
    %54 = arith.mulf %53, %53 : vector<8x32xf32>
    %cst_40 = arith.constant dense<0.000000e+00> : vector<8xf32>
    %55 = vector.multi_reduction <add>, %54, %cst_40 [1] : vector<8x32xf32> to vector<8xf32>
    %56 = vector.shape_cast %55 : vector<8xf32> to vector<8x1xf32>
    %cst_41 = arith.constant 3.200000e+01 : f32
    %57 = vector.broadcast %cst_41 : f32 to vector<8x1xf32>
    %58 = arith.divf %56, %57 : vector<8x1xf32>
    %cst_42 = arith.constant 9.99999974E-6 : f32
    %59 = vector.broadcast %cst_42 : f32 to vector<8x1xf32>
    %60 = arith.addf %58, %59 : vector<8x1xf32>
    %61 = math.rsqrt %60 : vector<8x1xf32>
    %62 = vector.broadcast %61 : vector<8x1xf32> to vector<8x32xf32>
    %63 = arith.mulf %53, %62 : vector<8x32xf32>
    %64 = vector.broadcast %46 : vector<1x32xf32> to vector<8x32xf32>
    %65 = arith.mulf %63, %64 : vector<8x32xf32>
    %66 = vector.broadcast %47 : vector<1x32xf32> to vector<8x32xf32>
    %67 = arith.addf %65, %66 : vector<8x32xf32>
    %68 = arith.truncf %67 : vector<8x32xf32> to vector<8x32xbf16>
    %c0_43 = arith.constant 0 : index
    %c0_44 = arith.constant 0 : index
    %69 = vector.load %arg12[%c0_43, %c0_44] : memref<32x64xbf16, #tpu.memory_space<vmem>>, vector<32x64xbf16>
    %cst_45 = arith.constant dense<0.000000e+00> : vector<8x64xf32>
    %70 = tpu.matmul %68, %69, %cst_45 {dimension_numbers = #tpu.dot_dimension_numbers<[1], [0], [0], [1], [0, 0, 1, 1], [], []>} : vector<8x32xbf16>, vector<32x64xbf16>, vector<8x64xf32> -> vector<8x64xf32>
    %c0_46 = arith.constant 0 : index
    %c0_47 = arith.constant 0 : index
    %71 = vector.load %arg13[%c0_46, %c0_47] : memref<1x64xf32, #tpu.memory_space<vmem>>, vector<1x64xf32>
    %72 = vector.broadcast %71 : vector<1x64xf32> to vector<8x64xf32>
    %73 = arith.addf %70, %72 : vector<8x64xf32>
    %cst_48 = arith.constant 0.000000e+00 : f32
    %74 = vector.broadcast %cst_48 : f32 to vector<8x64xf32>
    %75 = arith.maximumf %73, %74 : vector<8x64xf32>
    %76 = arith.truncf %75 : vector<8x64xf32> to vector<8x64xbf16>
    %c0_49 = arith.constant 0 : index
    %c0_50 = arith.constant 0 : index
    %77 = vector.load %arg14[%c0_49, %c0_50] : memref<64x32xbf16, #tpu.memory_space<vmem>>, vector<64x32xbf16>
    %cst_51 = arith.constant dense<0.000000e+00> : vector<8x32xf32>
    %78 = tpu.matmul %76, %77, %cst_51 {dimension_numbers = #tpu.dot_dimension_numbers<[1], [0], [0], [1], [0, 0, 1, 1], [], []>} : vector<8x64xbf16>, vector<64x32xbf16>, vector<8x32xf32> -> vector<8x32xf32>
    %c0_52 = arith.constant 0 : index
    %c0_53 = arith.constant 0 : index
    %79 = vector.load %arg15[%c0_52, %c0_53] : memref<1x32xf32, #tpu.memory_space<vmem>>, vector<1x32xf32>
    %80 = vector.broadcast %79 : vector<1x32xf32> to vector<8x32xf32>
    %81 = arith.addf %78, %80 : vector<8x32xf32>
    %82 = arith.addf %67, %81 : vector<8x32xf32>
    %c0_54 = arith.constant 0 : index
    %c0_55 = arith.constant 0 : index
    %83 = vector.load %arg16[%c0_54, %c0_55] : memref<1x32xf32, #tpu.memory_space<vmem>>, vector<1x32xf32>
    %c0_56 = arith.constant 0 : index
    %c0_57 = arith.constant 0 : index
    %84 = vector.load %arg17[%c0_56, %c0_57] : memref<1x32xf32, #tpu.memory_space<vmem>>, vector<1x32xf32>
    %cst_58 = arith.constant dense<0.000000e+00> : vector<8xf32>
    %85 = vector.multi_reduction <add>, %82, %cst_58 [1] : vector<8x32xf32> to vector<8xf32>
    %86 = vector.shape_cast %85 : vector<8xf32> to vector<8x1xf32>
    %cst_59 = arith.constant 3.200000e+01 : f32
    %87 = vector.broadcast %cst_59 : f32 to vector<8x1xf32>
    %88 = arith.divf %86, %87 : vector<8x1xf32>
    %89 = vector.broadcast %88 : vector<8x1xf32> to vector<8x32xf32>
    %90 = arith.subf %82, %89 : vector<8x32xf32>
    %91 = arith.mulf %90, %90 : vector<8x32xf32>
    %cst_60 = arith.constant dense<0.000000e+00> : vector<8xf32>
    %92 = vector.multi_reduction <add>, %91, %cst_60 [1] : vector<8x32xf32> to vector<8xf32>
    %93 = vector.shape_cast %92 : vector<8xf32> to vector<8x1xf32>
    %cst_61 = arith.constant 3.200000e+01 : f32
    %94 = vector.broadcast %cst_61 : f32 to vector<8x1xf32>
    %95 = arith.divf %93, %94 : vector<8x1xf32>
    %cst_62 = arith.constant 9.99999974E-6 : f32
    %96 = vector.broadcast %cst_62 : f32 to vector<8x1xf32>
    %97 = arith.addf %95, %96 : vector<8x1xf32>
    %98 = math.rsqrt %97 : vector<8x1xf32>
    %99 = vector.broadcast %98 : vector<8x1xf32> to vector<8x32xf32>
    %100 = arith.mulf %90, %99 : vector<8x32xf32>
    %101 = vector.broadcast %83 : vector<1x32xf32> to vector<8x32xf32>
    %102 = arith.mulf %100, %101 : vector<8x32xf32>
    %103 = vector.broadcast %84 : vector<1x32xf32> to vector<8x32xf32>
    %104 = arith.addf %102, %103 : vector<8x32xf32>
    %c0_63 = arith.constant 0 : index
    %c0_64 = arith.constant 0 : index
    %c0_65 = arith.constant 0 : index
    %105 = vector.load %arg18[%c0_63, %c0_64, %c0_65] : memref<1x8x32xf32, #tpu.memory_space<vmem>>, vector<1x8x32xf32>
    %106 = vector.shape_cast %105 : vector<1x8x32xf32> to vector<8x32xf32>
    %107 = vector.shape_cast %104 : vector<8x32xf32> to vector<1x8x32xf32>
    tpu.vector_store %arg18[%c0_63, %c0_64, %c0_65], %107 {strides = array<i32>} : memref<1x8x32xf32, #tpu.memory_space<vmem>>, vector<1x8x32xf32>,
    return
  }
  func.func @transform_0(%arg0: i32) -> (i32, i32, i32) {
    %c0_i32 = arith.constant 0 : i32
    %c0_i32_0 = arith.constant 0 : i32
    %c0_i32_1 = arith.constant 0 : i32
    return %arg0, %c0_i32, %c0_i32_0 : i32, i32, i32
  }
  func.func @transform_1(%arg0: i32) -> (i32, i32, i32) {
    %c0_i32 = arith.constant 0 : i32
    %c0_i32_0 = arith.constant 0 : i32
    %c0_i32_1 = arith.constant 0 : i32
    %c0_i32_2 = arith.constant 0 : i32
    return %c0_i32, %c0_i32_0, %c0_i32_1 : i32, i32, i32
  }
  func.func @transform_2(%arg0: i32) -> (i32, i32, i32) {
    %c0_i32 = arith.constant 0 : i32
    %c0_i32_0 = arith.constant 0 : i32
    %c0_i32_1 = arith.constant 0 : i32
    %c0_i32_2 = arith.constant 0 : i32
    return %c0_i32, %c0_i32_0, %c0_i32_1 : i32, i32, i32
  }
  func.func @transform_3(%arg0: i32) -> (i32, i32, i32) {
    %c0_i32 = arith.constant 0 : i32
    %c0_i32_0 = arith.constant 0 : i32
    %c0_i32_1 = arith.constant 0 : i32
    %c0_i32_2 = arith.constant 0 : i32
    return %c0_i32, %c0_i32_0, %c0_i32_1 : i32, i32, i32
  }
  func.func @transform_4(%arg0: i32) -> (i32, i32, i32) {
    %c0_i32 = arith.constant 0 : i32
    %c0_i32_0 = arith.constant 0 : i32
    %c0_i32_1 = arith.constant 0 : i32
    %c0_i32_2 = arith.constant 0 : i32
    return %c0_i32, %c0_i32_0, %c0_i32_1 : i32, i32, i32
  }
  func.func @transform_5(%arg0: i32) -> (i32, i32, i32) {
    %c0_i32 = arith.constant 0 : i32
    %c0_i32_0 = arith.constant 0 : i32
    %c0_i32_1 = arith.constant 0 : i32
    %c0_i32_2 = arith.constant 0 : i32
    return %c0_i32, %c0_i32_0, %c0_i32_1 : i32, i32, i32
  }
  func.func @transform_6(%arg0: i32) -> (i32, i32, i32) {
    %c0_i32 = arith.constant 0 : i32
    %c0_i32_0 = arith.constant 0 : i32
    %c0_i32_1 = arith.constant 0 : i32
    %c0_i32_2 = arith.constant 0 : i32
    return %c0_i32, %c0_i32_0, %c0_i32_1 : i32, i32, i32
  }
  func.func @transform_7(%arg0: i32) -> (i32, i32, i32) {
    %c0_i32 = arith.constant 0 : i32
    %c0_i32_0 = arith.constant 0 : i32
    %c0_i32_1 = arith.constant 0 : i32
    %c0_i32_2 = arith.constant 0 : i32
    return %c0_i32, %c0_i32_0, %c0_i32_1 : i32, i32, i32
  }
  func.func @transform_8(%arg0: i32) -> (i32, i32) {
    %c0_i32 = arith.constant 0 : i32
    %c0_i32_0 = arith.constant 0 : i32
    %c0_i32_1 = arith.constant 0 : i32
    return %c0_i32, %c0_i32_0 : i32, i32
  }
  func.func @transform_9(%arg0: i32) -> (i32, i32) {
    %c0_i32 = arith.constant 0 : i32
    %c0_i32_0 = arith.constant 0 : i32
    %c0_i32_1 = arith.constant 0 : i32
    return %c0_i32, %c0_i32_0 : i32, i32
  }
  func.func @transform_10(%arg0: i32) -> (i32, i32) {
    %c0_i32 = arith.constant 0 : i32
    %c0_i32_0 = arith.constant 0 : i32
    %c0_i32_1 = arith.constant 0 : i32
    return %c0_i32, %c0_i32_0 : i32, i32
  }
  func.func @transform_11(%arg0: i32) -> (i32, i32) {
    %c0_i32 = arith.constant 0 : i32
    %c0_i32_0 = arith.constant 0 : i32
    %c0_i32_1 = arith.constant 0 : i32
    return %c0_i32, %c0_i32_0 : i32, i32
  }
  func.func @transform_12(%arg0: i32) -> (i32, i32) {
    %c0_i32 = arith.constant 0 : i32
    %c0_i32_0 = arith.constant 0 : i32
    %c0_i32_1 = arith.constant 0 : i32
    return %c0_i32, %c0_i32_0 : i32, i32
  }
  func.func @transform_13(%arg0: i32) -> (i32, i32) {
    %c0_i32 = arith.constant 0 : i32
    %c0_i32_0 = arith.constant 0 : i32
    %c0_i32_1 = arith.constant 0 : i32
    return %c0_i32, %c0_i32_0 : i32, i32
  }
  func.func @transform_14(%arg0: i32) -> (i32, i32) {
    %c0_i32 = arith.constant 0 : i32
    %c0_i32_0 = arith.constant 0 : i32
    %c0_i32_1 = arith.constant 0 : i32
    return %c0_i32, %c0_i32_0 : i32, i32
  }
  func.func @transform_15(%arg0: i32) -> (i32, i32) {
    %c0_i32 = arith.constant 0 : i32
    %c0_i32_0 = arith.constant 0 : i32
    %c0_i32_1 = arith.constant 0 : i32
    return %c0_i32, %c0_i32_0 : i32, i32
  }
  func.func @transform_16(%arg0: i32) -> (i32, i32) {
    %c0_i32 = arith.constant 0 : i32
    %c0_i32_0 = arith.constant 0 : i32
    %c0_i32_1 = arith.constant 0 : i32
    return %c0_i32, %c0_i32_0 : i32, i32
  }
  func.func @transform_17(%arg0: i32) -> (i32, i32, i32) {
    %c0_i32 = arith.constant 0 : i32
    %c0_i32_0 = arith.constant 0 : i32
    %c0_i32_1 = arith.constant 0 : i32
    return %arg0, %c0_i32, %c0_i32_0 : i32, i32, i32
  }
}

</mosaic_0001>

<llo_original>
// kernel: tpu_custom_call.1
$region0: #{tpu_custom_call.1}
  #allocation0 [shape = 'u32[]', space=smem, size = 0x4, offset = 0x4, fixed_abs, tag = 'smem constant byte address 0x4 - core index']
  #allocation1 [shape = 'u32[144,128]{1,0:T(1,128)}', space=vmem, size = 0x12000, scoped, tag = 'internal scratch']
  %s0 = inlined_call_operand.hbm [shape: f32[2,8,32], index: 0, kind: input, shape index: {}]
  %s1 = inlined_call_operand.hbm [shape: bf16[4,32,8], index: 1, kind: input, shape index: {}]
  %s2 = inlined_call_operand.hbm [shape: f32[4,1,8], index: 2, kind: input, shape index: {}]
  %s3 = inlined_call_operand.hbm [shape: bf16[4,32,8], index: 3, kind: input, shape index: {}]
  %s4 = inlined_call_operand.hbm [shape: f32[4,1,8], index: 4, kind: input, shape index: {}]
  %s5 = inlined_call_operand.hbm [shape: bf16[4,32,8], index: 5, kind: input, shape index: {}]
  %s6 = inlined_call_operand.hbm [shape: f32[4,1,8], index: 6, kind: input, shape index: {}]
  %s7 = inlined_call_operand.hbm [shape: bf16[4,8,32], index: 7, kind: input, shape index: {}]
  %s8 = inlined_call_operand.hbm [shape: f32[1,32], index: 8, kind: input, shape index: {}]
  %s9 = inlined_call_operand.hbm [shape: f32[1,32], index: 9, kind: input, shape index: {}]
  %s10 = inlined_call_operand.hbm [shape: f32[1,32], index: 10, kind: input, shape index: {}]
  %s11 = inlined_call_operand.hbm [shape: bf16[32,64], index: 11, kind: input, shape index: {}]
  %s12 = inlined_call_operand.hbm [shape: f32[1,64], index: 12, kind: input, shape index: {}]
  %s13 = inlined_call_operand.hbm [shape: bf16[64,32], index: 13, kind: input, shape index: {}]
  %s14 = inlined_call_operand.hbm [shape: f32[1,32], index: 14, kind: input, shape index: {}]
  %s15 = inlined_call_operand.hbm [shape: f32[1,32], index: 15, kind: input, shape index: {}]
  %s16 = inlined_call_operand.hbm [shape: f32[1,32], index: 16, kind: input, shape index: {}]
  %s17 = inlined_call_operand.hbm [shape: f32[2,8,32], index: 17, kind: output, shape index: {}]
  %s18 = sld [smem:[#allocation0]]
  $region169: #{tpu_custom_call.1} parent=0
    _
  %s20 = ssub.s32 1, %s18
  %s21 = scalar_select 0, %s20, %s18
  $region1: #{tpu_custom_call.1} parent=0
    #allocation2 [shape = 'u8[8192]{0}', space=vmem, size = 0x2000, scoped, tag = 'input window, operand 0']
    #allocation3 [shape = 's32[2]{0}', space=sflag, size = 0x8, scoped, tag = 'scoped memory for tpu_custom_call.1']
    #allocation4 [shape = 's32[2]{0}', space=sflag, size = 0x8, scoped, tag = 'scoped memory for tpu_custom_call.1']
    #allocation5 [shape = 'u8[32768]{0}', space=vmem, size = 0x8000, scoped, tag = 'input window, operand 1, single buffered']
    #allocation6 [shape = 's32[1]{0}', space=sflag, size = 0x4, scoped, tag = 'scoped memory for tpu_custom_call.1']
    #allocation7 [shape = 'u8[2048]{0}', space=vmem, size = 0x800, scoped, tag = 'input window, operand 2, single buffered']
    #allocation8 [shape = 'u8[32768]{0}', space=vmem, size = 0x8000, scoped, tag = 'input window, operand 3, single buffered']
    #allocation9 [shape = 's32[1]{0}', space=sflag, size = 0x4, scoped, tag = 'scoped memory for tpu_custom_call.1']
    #allocation10 [shape = 'u8[2048]{0}', space=vmem, size = 0x800, scoped, tag = 'input window, operand 4, single buffered']
    #allocation11 [shape = 'u8[32768]{0}', space=vmem, size = 0x8000, scoped, tag = 'input window, operand 5, single buffered']
    #allocation12 [shape = 's32[1]{0}', space=sflag, size = 0x4, scoped, tag = 'scoped memory for tpu_custom_call.1']
    #allocation13 [shape = 'u8[2048]{0}', space=vmem, size = 0x800, scoped, tag = 'input window, operand 6, single buffered']
    #allocation14 [shape = 'u8[8192]{0}', space=vmem, size = 0x2000, scoped, tag = 'input window, operand 7, single buffered']
    #allocation15 [shape = 's32[1]{0}', space=sflag, size = 0x4, scoped, tag = 'scoped memory for tpu_custom_call.1']
    #allocation16 [shape = 'u8[512]{0}', space=vmem, size = 0x400, scoped, tag = 'input window, operand 8, single buffered']
    #allocation17 [shape = 'u8[512]{0}', space=vmem, size = 0x400, scoped, tag = 'input window, operand 9, single buffered']
    #allocation18 [shape = 's32[1]{0}', space=sflag, size = 0x4, scoped, tag = 'scoped memory for tpu_custom_call.1']
    #allocation19 [shape = 'u8[512]{0}', space=vmem, size = 0x400, scoped, tag = 'input window, operand 10, single buffered']
    #allocation20 [shape = 'u8[8192]{0}', space=vmem, size = 0x2000, scoped, tag = 'input window, operand 11, single buffered']
    #allocation21 [shape = 's32[1]{0}', space=sflag, size = 0x4, scoped, tag = 'scoped memory for tpu_custom_call.1']
    #allocation22 [shape = 'u8[512]{0}', space=vmem, size = 0x400, scoped, tag = 'input window, operand 12, single buffered']
    #allocation23 [shape = 'u8[16384]{0}', space=vmem, size = 0x4000, scoped, tag = 'input window, operand 13, single buffered']
    #allocation24 [shape = 's32[1]{0}', space=sflag, size = 0x4, scoped, tag = 'scoped memory for tpu_custom_call.1']
    #allocation25 [shape = 'u8[512]{0}', space=vmem, size = 0x400, scoped, tag = 'input window, operand 14, single buffered']
    #allocation26 [shape = 'u8[512]{0}', space=vmem, size = 0x400, scoped, tag = 'input window, operand 15, single buffered']
    #allocation27 [shape = 's32[1]{0}', space=sflag, size = 0x4, scoped, tag = 'scoped memory for tpu_custom_call.1']
    #allocation28 [shape = 'u8[512]{0}', space=vmem, size = 0x400, scoped, tag = 'input window, operand 16, single buffered']
    #allocation29 [shape = 'u8[8192]{0}', space=vmem, size = 0x2000, scoped, tag = 'output window, operand 0']
    %22 = vsyncpa [#allocation3], 0
    %s23 = scalar_lea.sflag [#allocation3], 1
    %24 = vsyncpa %s23, 0
    %25 = vsyncpa [#allocation6], 0
    %26 = vsyncpa [#allocation9], 0
    %27 = vsyncpa [#allocation12], 0
    %28 = vsyncpa [#allocation15], 0
    %29 = vsyncpa [#allocation18], 0
    %30 = vsyncpa [#allocation21], 0
    %31 = vsyncpa [#allocation24], 0
    %32 = vsyncpa [#allocation27], 0
    %33 = vsyncpa [#allocation4], 0
    %s34 = scalar_lea.sflag [#allocation4], 1
    %35 = vsyncpa %s34, 0
    loop: start=0, step=1, limit=4
    $region2: #{tpu_custom_call.1} parent=1 // loop_pre_header
      _
    $region3: #{tpu_custom_call.1} parent=1 // loop_header
      %s37 = sphi 0, %s41
      %p38 = scmp.ge.s32.totalorder %s37, 4
      %s47 = sphi 0, %s49
      %s50 = sphi 0, %s47
      %s51 = sphi 0, %s50
      %s67 = sphi 0, %s51
      %s71 = sphi 0, %s71
      %s73 = sphi 0, %s71
      %s74 = sphi 0, %s73
      %s88 = sphi 0, %s74
      %s92 = sphi 0, %s92
      %s94 = sphi 0, %s92
      %s95 = sphi 0, %s94
      %s109 = sphi 0, %s95
      %s113 = sphi 0, %s113
      %s115 = sphi 0, %s113
      %s116 = sphi 0, %s115
      %s130 = sphi 0, %s116
      %s134 = sphi 0, %s134
      %s136 = sphi 0, %s134
      %s137 = sphi 0, %s136
      %s151 = sphi 0, %s137
      %s155 = sphi 0, %s155
      %s157 = sphi 0, %s155
      %s158 = sphi 0, %s157
      %s172 = sphi 0, %s158
      %s176 = sphi 0, %s176
      %s178 = sphi 0, %s176
      %s179 = sphi 0, %s178
      %s193 = sphi 0, %s179
      %s197 = sphi 0, %s197
      %s199 = sphi 0, %s197
      %s200 = sphi 0, %s199
      %s214 = sphi 0, %s200
      %s218 = sphi 0, %s218
      %s220 = sphi 0, %s218
      %s221 = sphi 0, %s220
      %s235 = sphi 0, %s221
      %s239 = sphi 0, %s239
      %s241 = sphi 0, %s239
      %s242 = sphi 0, %s241
      %s256 = sphi 0, %s242
      %s260 = sphi 0, %s260
      %s262 = sphi 0, %s260
      %s263 = sphi 0, %s262
      %s277 = sphi 0, %s263
      %s281 = sphi 0, %s281
      %s283 = sphi 0, %s281
      %s284 = sphi 0, %s283
      %s298 = sphi 0, %s284
      %s302 = sphi 0, %s302
      %s304 = sphi 0, %s302
      %s305 = sphi 0, %s304
      %s319 = sphi 0, %s305
      %s323 = sphi 0, %s323
      %s325 = sphi 0, %s323
      %s326 = sphi 0, %s325
      %s340 = sphi 0, %s326
      %s344 = sphi 0, %s344
      %s346 = sphi 0, %s344
      %s347 = sphi 0, %s346
      %s361 = sphi 0, %s347
      %s365 = sphi 0, %s365
      %s367 = sphi 0, %s365
      %s368 = sphi 0, %s367
      %s382 = sphi 0, %s368
      %s386 = sphi 0, %s386
      %s388 = sphi 0, %s386
      %s389 = sphi 0, %s388
      %s403 = sphi 0, %s389
      %s409 = sphi 0, %s411
      %s412 = sphi 0, %s409
      %s413 = sphi 0, %s412
      %s429 = sphi 0, %s413
    $region4: #{tpu_custom_call.1} parent=1 // loop_header_branch
      %40 = sbr.rel (%p38) target = $region8
    $region5: #{tpu_custom_call.1} parent=1 // loop_body
      %s42 = ssub.s32 %s37, 1
      %s43 = ssub.s32 %s37, 2
      %s44 = sadd.s32 %s37, 1
      %s45 = ssub.s32 %s37, %s44
      %p46 = scmp.eq.s32.totalorder %s45, 0
      %s48 = sadd.s32 %s47, 1
      %s49 = scalar_select %p46, %s47, %s48
      %p52 = pneg %p46
      %p53 = scmp.eq.s32.totalorder %s37, 1
      %p54 = por %p52, %p53
      %p55 = scmp.ne.s32.totalorder %s47, %s50
      %p56 = scmp.eq.s32.totalorder %s37, 0
      %p57 = por %p55, %p56
      %p58 = scmp.ne.s32.totalorder %s47, %s50
      %p59 = scmp.eq.s32.totalorder %s42, 1
      %p60 = por %p58, %p59
      %p61 = scmp.ne.s32.totalorder %s50, %s51
      %p62 = scmp.eq.s32.totalorder %s42, 0
      %p63 = por %p61, %p62
      %p64 = scmp.ne.s32.totalorder %s50, %s51
      %p65 = scmp.eq.s32.totalorder %s43, 1
      %p66 = por %p64, %p65
      %p68 = scmp.ne.s32.totalorder %s51, %s67
      %p69 = scmp.eq.s32.totalorder %s43, 0
      %p70 = por %p68, %p69
      %s72 = sadd.s32 %s71, 1
      %p75 = scmp.eq.s32.totalorder %s37, 1
      %p76 = scmp.ne.s32.totalorder %s71, %s73
      %p77 = scmp.eq.s32.totalorder %s37, 0
      %p78 = por %p76, %p77
      %p79 = scmp.ne.s32.totalorder %s71, %s73
      %p80 = scmp.eq.s32.totalorder %s42, 1
      %p81 = por %p79, %p80
      %p82 = scmp.ne.s32.totalorder %s73, %s74
      %p83 = scmp.eq.s32.totalorder %s42, 0
      %p84 = por %p82, %p83
      %p85 = scmp.ne.s32.totalorder %s73, %s74
      %p86 = scmp.eq.s32.totalorder %s43, 1
      %p87 = por %p85, %p86
      %p89 = scmp.ne.s32.totalorder %s74, %s88
      %p90 = scmp.eq.s32.totalorder %s43, 0
      %p91 = por %p89, %p90
      %s93 = sadd.s32 %s92, 1
      %p96 = scmp.eq.s32.totalorder %s37, 1
      %p97 = scmp.ne.s32.totalorder %s92, %s94
      %p98 = scmp.eq.s32.totalorder %s37, 0
      %p99 = por %p97, %p98
      %p100 = scmp.ne.s32.totalorder %s92, %s94
      %p101 = scmp.eq.s32.totalorder %s42, 1
      %p102 = por %p100, %p101
      %p103 = scmp.ne.s32.totalorder %s94, %s95
      %p104 = scmp.eq.s32.totalorder %s42, 0
      %p105 = por %p103, %p104
      %p106 = scmp.ne.s32.totalorder %s94, %s95
      %p107 = scmp.eq.s32.totalorder %s43, 1
      %p108 = por %p106, %p107
      %p110 = scmp.ne.s32.totalorder %s95, %s109
      %p111 = scmp.eq.s32.totalorder %s43, 0
      %p112 = por %p110, %p111
      %s114 = sadd.s32 %s113, 1
      %p117 = scmp.eq.s32.totalorder %s37, 1
      %p118 = scmp.ne.s32.totalorder %s113, %s115
      %p119 = scmp.eq.s32.totalorder %s37, 0
      %p120 = por %p118, %p119
      %p121 = scmp.ne.s32.totalorder %s113, %s115
      %p122 = scmp.eq.s32.totalorder %s42, 1
      %p123 = por %p121, %p122
      %p124 = scmp.ne.s32.totalorder %s115, %s116
      %p125 = scmp.eq.s32.totalorder %s42, 0
      %p126 = por %p124, %p125
      %p127 = scmp.ne.s32.totalorder %s115, %s116
      %p128 = scmp.eq.s32.totalorder %s43, 1
      %p129 = por %p127, %p128
      %p131 = scmp.ne.s32.totalorder %s116, %s130
      %p132 = scmp.eq.s32.totalorder %s43, 0
      %p133 = por %p131, %p132
      %s135 = sadd.s32 %s134, 1
      %p138 = scmp.eq.s32.totalorder %s37, 1
      %p139 = scmp.ne.s32.totalorder %s134, %s136
      %p140 = scmp.eq.s32.totalorder %s37, 0
      %p141 = por %p139, %p140
      %p142 = scmp.ne.s32.totalorder %s134, %s136
      %p143 = scmp.eq.s32.totalorder %s42, 1
      %p144 = por %p142, %p143
      %p145 = scmp.ne.s32.totalorder %s136, %s137
      %p146 = scmp.eq.s32.totalorder %s42, 0
      %p147 = por %p145, %p146
      %p148 = scmp.ne.s32.totalorder %s136, %s137
      %p149 = scmp.eq.s32.totalorder %s43, 1
      %p150 = por %p148, %p149
      %p152 = scmp.ne.s32.totalorder %s137, %s151
      %p153 = scmp.eq.s32.totalorder %s43, 0
      %p154 = por %p152, %p153
      %s156 = sadd.s32 %s155, 1
      %p159 = scmp.eq.s32.totalorder %s37, 1
      %p160 = scmp.ne.s32.totalorder %s155, %s157
      %p161 = scmp.eq.s32.totalorder %s37, 0
      %p162 = por %p160, %p161
      %p163 = scmp.ne.s32.totalorder %s155, %s157
      %p164 = scmp.eq.s32.totalorder %s42, 1
      %p165 = por %p163, %p164
      %p166 = scmp.ne.s32.totalorder %s157, %s158
      %p167 = scmp.eq.s32.totalorder %s42, 0
      %p168 = por %p166, %p167
      %p169 = scmp.ne.s32.totalorder %s157, %s158
      %p170 = scmp.eq.s32.totalorder %s43, 1
      %p171 = por %p169, %p170
      %p173 = scmp.ne.s32.totalorder %s158, %s172
      %p174 = scmp.eq.s32.totalorder %s43, 0
      %p175 = por %p173, %p174
      %s177 = sadd.s32 %s176, 1
      %p180 = scmp.eq.s32.totalorder %s37, 1
      %p181 = scmp.ne.s32.totalorder %s176, %s178
      %p182 = scmp.eq.s32.totalorder %s37, 0
      %p183 = por %p181, %p182
      %p184 = scmp.ne.s32.totalorder %s176, %s178
      %p185 = scmp.eq.s32.totalorder %s42, 1
      %p186 = por %p184, %p185
      %p187 = scmp.ne.s32.totalorder %s178, %s179
      %p188 = scmp.eq.s32.totalorder %s42, 0
      %p189 = por %p187, %p188
      %p190 = scmp.ne.s32.totalorder %s178, %s179
      %p191 = scmp.eq.s32.totalorder %s43, 1
      %p192 = por %p190, %p191
      %p194 = scmp.ne.s32.totalorder %s179, %s193
      %p195 = scmp.eq.s32.totalorder %s43, 0
      %p196 = por %p194, %p195
      %s198 = sadd.s32 %s197, 1
      %p201 = scmp.eq.s32.totalorder %s37, 1
      %p202 = scmp.ne.s32.totalorder %s197, %s199
      %p203 = scmp.eq.s32.totalorder %s37, 0
      %p204 = por %p202, %p203
      %p205 = scmp.ne.s32.totalorder %s197, %s199
      %p206 = scmp.eq.s32.totalorder %s42, 1
      %p207 = por %p205, %p206
      %p208 = scmp.ne.s32.totalorder %s199, %s200
      %p209 = scmp.eq.s32.totalorder %s42, 0
      %p210 = por %p208, %p209
      %p211 = scmp.ne.s32.totalorder %s199, %s200
      %p212 = scmp.eq.s32.totalorder %s43, 1
      %p213 = por %p211, %p212
      %p215 = scmp.ne.s32.totalorder %s200, %s214
      %p216 = scmp.eq.s32.totalorder %s43, 0
      %p217 = por %p215, %p216
      %s219 = sadd.s32 %s218, 1
      %p222 = scmp.eq.s32.totalorder %s37, 1
      %p223 = scmp.ne.s32.totalorder %s218, %s220
      %p224 = scmp.eq.s32.totalorder %s37, 0
      %p225 = por %p223, %p224
      %p226 = scmp.ne.s32.totalorder %s218, %s220
      %p227 = scmp.eq.s32.totalorder %s42, 1
      %p228 = por %p226, %p227
      %p229 = scmp.ne.s32.totalorder %s220, %s221
      %p230 = scmp.eq.s32.totalorder %s42, 0
      %p231 = por %p229, %p230
      %p232 = scmp.ne.s32.totalorder %s220, %s221
      %p233 = scmp.eq.s32.totalorder %s43, 1
      %p234 = por %p232, %p233
      %p236 = scmp.ne.s32.totalorder %s221, %s235
      %p237 = scmp.eq.s32.totalorder %s43, 0
      %p238 = por %p236, %p237
      %s240 = sadd.s32 %s239, 1
      %p243 = scmp.eq.s32.totalorder %s37, 1
      %p244 = scmp.ne.s32.totalorder %s239, %s241
      %p245 = scmp.eq.s32.totalorder %s37, 0
      %p246 = por %p244, %p245
      %p247 = scmp.ne.s32.totalorder %s239, %s241
      %p248 = scmp.eq.s32.totalorder %s42, 1
      %p249 = por %p247, %p248
      %p250 = scmp.ne.s32.totalorder %s241, %s242
      %p251 = scmp.eq.s32.totalorder %s42, 0
      %p252 = por %p250, %p251
      %p253 = scmp.ne.s32.totalorder %s241, %s242
      %p254 = scmp.eq.s32.totalorder %s43, 1
      %p255 = por %p253, %p254
      %p257 = scmp.ne.s32.totalorder %s242, %s256
      %p258 = scmp.eq.s32.totalorder %s43, 0
      %p259 = por %p257, %p258
      %s261 = sadd.s32 %s260, 1
      %p264 = scmp.eq.s32.totalorder %s37, 1
      %p265 = scmp.ne.s32.totalorder %s260, %s262
      %p266 = scmp.eq.s32.totalorder %s37, 0
      %p267 = por %p265, %p266
      %p268 = scmp.ne.s32.totalorder %s260, %s262
      %p269 = scmp.eq.s32.totalorder %s42, 1
      %p270 = por %p268, %p269
      %p271 = scmp.ne.s32.totalorder %s262, %s263
      %p272 = scmp.eq.s32.totalorder %s42, 0
      %p273 = por %p271, %p272
      %p274 = scmp.ne.s32.totalorder %s262, %s263
      %p275 = scmp.eq.s32.totalorder %s43, 1
      %p276 = por %p274, %p275
      %p278 = scmp.ne.s32.totalorder %s263, %s277
      %p279 = scmp.eq.s32.totalorder %s43, 0
      %p280 = por %p278, %p279
      %s282 = sadd.s32 %s281, 1
      %p285 = scmp.eq.s32.totalorder %s37, 1
      %p286 = scmp.ne.s32.totalorder %s281, %s283
      %p287 = scmp.eq.s32.totalorder %s37, 0
      %p288 = por %p286, %p287
      %p289 = scmp.ne.s32.totalorder %s281, %s283
      %p290 = scmp.eq.s32.totalorder %s42, 1
      %p291 = por %p289, %p290
      %p292 = scmp.ne.s32.totalorder %s283, %s284
      %p293 = scmp.eq.s32.totalorder %s42, 0
      %p294 = por %p292, %p293
      %p295 = scmp.ne.s32.totalorder %s283, %s284
      %p296 = scmp.eq.s32.totalorder %s43, 1
      %p297 = por %p295, %p296
      %p299 = scmp.ne.s32.totalorder %s284, %s298
      %p300 = scmp.eq.s32.totalorder %s43, 0
      %p301 = por %p299, %p300
      %s303 = sadd.s32 %s302, 1
      %p306 = scmp.eq.s32.totalorder %s37, 1
      %p307 = scmp.ne.s32.totalorder %s302, %s304
      %p308 = scmp.eq.s32.totalorder %s37, 0
      %p309 = por %p307, %p308
      %p310 = scmp.ne.s32.totalorder %s302, %s304
      %p311 = scmp.eq.s32.totalorder %s42, 1
      %p312 = por %p310, %p311
      %p313 = scmp.ne.s32.totalorder %s304, %s305
      %p314 = scmp.eq.s32.totalorder %s42, 0
      %p315 = por %p313, %p314
      %p316 = scmp.ne.s32.totalorder %s304, %s305
      %p317 = scmp.eq.s32.totalorder %s43, 1
      %p318 = por %p316, %p317
      %p320 = scmp.ne.s32.totalorder %s305, %s319
      %p321 = scmp.eq.s32.totalorder %s43, 0
      %p322 = por %p320, %p321
      %s324 = sadd.s32 %s323, 1
      %p327 = scmp.eq.s32.totalorder %s37, 1
      %p328 = scmp.ne.s32.totalorder %s323, %s325
      %p329 = scmp.eq.s32.totalorder %s37, 0
      %p330 = por %p328, %p329
      %p331 = scmp.ne.s32.totalorder %s323, %s325
      %p332 = scmp.eq.s32.totalorder %s42, 1
      %p333 = por %p331, %p332
      %p334 = scmp.ne.s32.totalorder %s325, %s326
      %p335 = scmp.eq.s32.totalorder %s42, 0
      %p336 = por %p334, %p335
      %p337 = scmp.ne.s32.totalorder %s325, %s326
      %p338 = scmp.eq.s32.totalorder %s43, 1
      %p339 = por %p337, %p338
      %p341 = scmp.ne.s32.totalorder %s326, %s340
      %p342 = scmp.eq.s32.totalorder %s43, 0
      %p343 = por %p341, %p342
      %s345 = sadd.s32 %s344, 1
      %p348 = scmp.eq.s32.totalorder %s37, 1
      %p349 = scmp.ne.s32.totalorder %s344, %s346
      %p350 = scmp.eq.s32.totalorder %s37, 0
      %p351 = por %p349, %p350
      %p352 = scmp.ne.s32.totalorder %s344, %s346
      %p353 = scmp.eq.s32.totalorder %s42, 1
      %p354 = por %p352, %p353
      %p355 = scmp.ne.s32.totalorder %s346, %s347
      %p356 = scmp.eq.s32.totalorder %s42, 0
      %p357 = por %p355, %p356
      %p358 = scmp.ne.s32.totalorder %s346, %s347
      %p359 = scmp.eq.s32.totalorder %s43, 1
      %p360 = por %p358, %p359
      %p362 = scmp.ne.s32.totalorder %s347, %s361
      %p363 = scmp.eq.s32.totalorder %s43, 0
      %p364 = por %p362, %p363
      %s366 = sadd.s32 %s365, 1
      %p369 = scmp.eq.s32.totalorder %s37, 1
      %p370 = scmp.ne.s32.totalorder %s365, %s367
      %p371 = scmp.eq.s32.totalorder %s37, 0
      %p372 = por %p370, %p371
      %p373 = scmp.ne.s32.totalorder %s365, %s367
      %p374 = scmp.eq.s32.totalorder %s42, 1
      %p375 = por %p373, %p374
      %p376 = scmp.ne.s32.totalorder %s367, %s368
      %p377 = scmp.eq.s32.totalorder %s42, 0
      %p378 = por %p376, %p377
      %p379 = scmp.ne.s32.totalorder %s367, %s368
      %p380 = scmp.eq.s32.totalorder %s43, 1
      %p381 = por %p379, %p380
      %p383 = scmp.ne.s32.totalorder %s368, %s382
      %p384 = scmp.eq.s32.totalorder %s43, 0
      %p385 = por %p383, %p384
      %s387 = sadd.s32 %s386, 1
      %p390 = scmp.eq.s32.totalorder %s37, 1
      %p391 = scmp.ne.s32.totalorder %s386, %s388
      %p392 = scmp.eq.s32.totalorder %s37, 0
      %p393 = por %p391, %p392
      %p394 = scmp.ne.s32.totalorder %s386, %s388
      %p395 = scmp.eq.s32.totalorder %s42, 1
      %p396 = por %p394, %p395
      %p397 = scmp.ne.s32.totalorder %s388, %s389
      %p398 = scmp.eq.s32.totalorder %s42, 0
      %p399 = por %p397, %p398
      %p400 = scmp.ne.s32.totalorder %s388, %s389
      %p401 = scmp.eq.s32.totalorder %s43, 1
      %p402 = por %p400, %p401
      %p404 = scmp.ne.s32.totalorder %s389, %s403
      %p405 = scmp.eq.s32.totalorder %s43, 0
      %p406 = por %p404, %p405
      %s407 = ssub.s32 %s37, %s44
      %p408 = scmp.eq.s32.totalorder %s407, 0
      %s410 = sadd.s32 %s409, 1
      %s411 = scalar_select %p408, %s409, %s410
      %p414 = pneg %p408
      %p415 = scmp.eq.s32.totalorder %s37, 1
      %p416 = por %p414, %p415
      %p417 = scmp.ne.s32.totalorder %s409, %s412
      %p418 = scmp.eq.s32.totalorder %s37, 0
      %p419 = por %p417, %p418
      %p420 = scmp.ne.s32.totalorder %s409, %s412
      %p421 = scmp.eq.s32.totalorder %s42, 1
      %p422 = por %p420, %p421
      %p423 = scmp.ne.s32.totalorder %s412, %s413
      %p424 = scmp.eq.s32.totalorder %s42, 0
      %p425 = por %p423, %p424
      %p426 = scmp.ne.s32.totalorder %s412, %s413
      %p427 = scmp.eq.s32.totalorder %s43, 1
      %p428 = por %p426, %p427
      %p430 = scmp.ne.s32.totalorder %s413, %s429
      %p431 = scmp.eq.s32.totalorder %s43, 0
      %p432 = por %p430, %p431
      %p433 = scmp.le.s32.totalorder 1, %s37
      %p434 = scmp.lt.s32.totalorder %s37, 3
      %p435 = pnand %p433, %p434
      %p436 = pneg %p435
      // Predicated region
      $region9: #{tpu_custom_call.1} parent=5 // pred_check
        _
      $region10: #{tpu_custom_call.1} parent=5 // pred_check_branch
        %438 = sbr.rel (%p435) target = $region12
      $region11: #{tpu_custom_call.1} parent=5 // pred_region
        %s439 = ssub.s32 %s37, 1
        // Predicated region
        $region13: #{tpu_custom_call.1} parent=11 // pred_check
          %p440 = pneg %p84
        $region14: #{tpu_custom_call.1} parent=11 // pred_check_branch
          %442 = sbr.rel (%p440) target = $region16
        $region15: #{tpu_custom_call.1} parent=11 // pred_region
          %s444 = ssub.s32 1024, 1024
          %445 = vsyncadd [#allocation6], %s444
          %s446 = sshll.u32 [#allocation5], 4
          %s447 = int_to_ptr.vmem [resolvable:$true] %s446
          %452 = dma.hbm_to_vmem [thread:$0]  %s1, 1024, %s447, [#allocation6], 64, 64, 4
        $region16: #{tpu_custom_call.1} parent=11 // pred_fallthru
          _
        // Predicated region
        $region17: #{tpu_custom_call.1} parent=11 // pred_check
          %p453 = pneg %p105
        $region18: #{tpu_custom_call.1} parent=11 // pred_check_branch
          %455 = sbr.rel (%p453) target = $region20
        $region19: #{tpu_custom_call.1} parent=11 // pred_region
          %s457 = ssub.s32 64, 64
          %458 = vsyncadd [#allocation6], %s457
          %s459 = sshll.u32 [#allocation7], 4
          %s460 = int_to_ptr.vmem [resolvable:$true] %s459
          %465 = dma.hbm_to_vmem [thread:$0]  %s2, 64, %s460, [#allocation6], 16, 16, 1
        $region20: #{tpu_custom_call.1} parent=11 // pred_fallthru
          _
        // Predicated region
        $region21: #{tpu_custom_call.1} parent=11 // pred_check
          %p466 = pneg %p126
        $region22: #{tpu_custom_call.1} parent=11 // pred_check_branch
          %468 = sbr.rel (%p466) target = $region24
        $region23: #{tpu_custom_call.1} parent=11 // pred_region
          %s470 = ssub.s32 1024, 1024
          %471 = vsyncadd [#allocation9], %s470
          %s472 = sshll.u32 [#allocation8], 4
          %s473 = int_to_ptr.vmem [resolvable:$true] %s472
          %478 = dma.hbm_to_vmem [thread:$0]  %s3, 1024, %s473, [#allocation9], 64, 64, 4
        $region24: #{tpu_custom_call.1} parent=11 // pred_fallthru
          _
        // Predicated region
        $region25: #{tpu_custom_call.1} parent=11 // pred_check
          %p479 = pneg %p147
        $region26: #{tpu_custom_call.1} parent=11 // pred_check_branch
          %481 = sbr.rel (%p479) target = $region28
        $region27: #{tpu_custom_call.1} parent=11 // pred_region
          %s483 = ssub.s32 64, 64
          %484 = vsyncadd [#allocation9], %s483
          %s485 = sshll.u32 [#allocation10], 4
          %s486 = int_to_ptr.vmem [resolvable:$true] %s485
          %491 = dma.hbm_to_vmem [thread:$0]  %s4, 64, %s486, [#allocation9], 16, 16, 1
        $region28: #{tpu_custom_call.1} parent=11 // pred_fallthru
          _
        // Predicated region
        $region29: #{tpu_custom_call.1} parent=11 // pred_check
          %p492 = pneg %p168
        $region30: #{tpu_custom_call.1} parent=11 // pred_check_branch
          %494 = sbr.rel (%p492) target = $region32
        $region31: #{tpu_custom_call.1} parent=11 // pred_region
          %s496 = ssub.s32 1024, 1024
          %497 = vsyncadd [#allocation12], %s496
          %s498 = sshll.u32 [#allocation11], 4
          %s499 = int_to_ptr.vmem [resolvable:$true] %s498
          %504 = dma.hbm_to_vmem [thread:$0]  %s5, 1024, %s499, [#allocation12], 64, 64, 4
        $region32: #{tpu_custom_call.1} parent=11 // pred_fallthru
          _
        // Predicated region
        $region33: #{tpu_custom_call.1} parent=11 // pred_check
          %p505 = pneg %p189
        $region34: #{tpu_custom_call.1} parent=11 // pred_check_branch
          %507 = sbr.rel (%p505) target = $region36
        $region35: #{tpu_custom_call.1} parent=11 // pred_region
          %s509 = ssub.s32 64, 64
          %510 = vsyncadd [#allocation12], %s509
          %s511 = sshll.u32 [#allocation13], 4
          %s512 = int_to_ptr.vmem [resolvable:$true] %s511
          %517 = dma.hbm_to_vmem [thread:$0]  %s6, 64, %s512, [#allocation12], 16, 16, 1
        $region36: #{tpu_custom_call.1} parent=11 // pred_fallthru
          _
        // Predicated region
        $region37: #{tpu_custom_call.1} parent=11 // pred_check
          %p518 = pneg %p210
        $region38: #{tpu_custom_call.1} parent=11 // pred_check_branch
          %520 = sbr.rel (%p518) target = $region40
        $region39: #{tpu_custom_call.1} parent=11 // pred_region
          %s522 = ssub.s32 256, 256
          %523 = vsyncadd [#allocation15], %s522
          %s524 = sshll.u32 [#allocation14], 4
          %s525 = int_to_ptr.vmem [resolvable:$true] %s524
          %530 = dma.hbm_to_vmem [thread:$0]  %s7, 256, %s525, [#allocation15], 64, 64, 4
        $region40: #{tpu_custom_call.1} parent=11 // pred_fallthru
          _
        // Predicated region
        $region41: #{tpu_custom_call.1} parent=11 // pred_check
          %p531 = pneg %p231
        $region42: #{tpu_custom_call.1} parent=11 // pred_check_branch
          %533 = sbr.rel (%p531) target = $region44
        $region43: #{tpu_custom_call.1} parent=11 // pred_region
          %s535 = ssub.s32 16, 16
          %536 = vsyncadd [#allocation15], %s535
          %s538 = sshll.u32 [#allocation16], 4
          %s539 = int_to_ptr.vmem [resolvable:$true] %s538
          %541 = dma.hbm_to_vmem [thread:$0]  %s8, 16, %s539, [#allocation15]
        $region44: #{tpu_custom_call.1} parent=11 // pred_fallthru
          _
        // Predicated region
        $region45: #{tpu_custom_call.1} parent=11 // pred_check
          %p542 = pneg %p252
        $region46: #{tpu_custom_call.1} parent=11 // pred_check_branch
          %544 = sbr.rel (%p542) target = $region48
        $region47: #{tpu_custom_call.1} parent=11 // pred_region
          %s546 = ssub.s32 16, 16
          %547 = vsyncadd [#allocation18], %s546
          %s549 = sshll.u32 [#allocation17], 4
          %s550 = int_to_ptr.vmem [resolvable:$true] %s549
          %552 = dma.hbm_to_vmem [thread:$0]  %s9, 16, %s550, [#allocation18]
        $region48: #{tpu_custom_call.1} parent=11 // pred_fallthru
          _
        // Predicated region
        $region49: #{tpu_custom_call.1} parent=11 // pred_check
          %p553 = pneg %p273
        $region50: #{tpu_custom_call.1} parent=11 // pred_check_branch
          %555 = sbr.rel (%p553) target = $region52
        $region51: #{tpu_custom_call.1} parent=11 // pred_region
          %s557 = ssub.s32 16, 16
          %558 = vsyncadd [#allocation18], %s557
          %s560 = sshll.u32 [#allocation19], 4
          %s561 = int_to_ptr.vmem [resolvable:$true] %s560
          %563 = dma.hbm_to_vmem [thread:$0]  %s10, 16, %s561, [#allocation18]
        $region52: #{tpu_custom_call.1} parent=11 // pred_fallthru
          _
        // Predicated region
        $region53: #{tpu_custom_call.1} parent=11 // pred_check
          %p564 = pneg %p294
        $region54: #{tpu_custom_call.1} parent=11 // pred_check_branch
          %566 = sbr.rel (%p564) target = $region56
        $region55: #{tpu_custom_call.1} parent=11 // pred_region
          %s568 = ssub.s32 256, 256
          %569 = vsyncadd [#allocation21], %s568
          %s570 = sshll.u32 [#allocation20], 4
          %s571 = int_to_ptr.vmem [resolvable:$true] %s570
          %576 = dma.hbm_to_vmem [thread:$0]  %s11, 256, %s571, [#allocation21], 64, 64, 4
        $region56: #{tpu_custom_call.1} parent=11 // pred_fallthru
          _
        // Predicated region
        $region57: #{tpu_custom_call.1} parent=11 // pred_check
          %p577 = pneg %p315
        $region58: #{tpu_custom_call.1} parent=11 // pred_check_branch
          %579 = sbr.rel (%p577) target = $region60
        $region59: #{tpu_custom_call.1} parent=11 // pred_region
          %s581 = ssub.s32 16, 16
          %582 = vsyncadd [#allocation21], %s581
          %s584 = sshll.u32 [#allocation22], 4
          %s585 = int_to_ptr.vmem [resolvable:$true] %s584
          %587 = dma.hbm_to_vmem [thread:$0]  %s12, 16, %s585, [#allocation21]
        $region60: #{tpu_custom_call.1} parent=11 // pred_fallthru
          _
        // Predicated region
        $region61: #{tpu_custom_call.1} parent=11 // pred_check
          %p588 = pneg %p336
        $region62: #{tpu_custom_call.1} parent=11 // pred_check_branch
          %590 = sbr.rel (%p588) target = $region64
        $region63: #{tpu_custom_call.1} parent=11 // pred_region
          %s592 = ssub.s32 512, 512
          %593 = vsyncadd [#allocation24], %s592
          %s594 = sshll.u32 [#allocation23], 4
          %s595 = int_to_ptr.vmem [resolvable:$true] %s594
          %600 = dma.hbm_to_vmem [thread:$0]  %s13, 512, %s595, [#allocation24], 64, 64, 4
        $region64: #{tpu_custom_call.1} parent=11 // pred_fallthru
          _
        // Predicated region
        $region65: #{tpu_custom_call.1} parent=11 // pred_check
          %p601 = pneg %p357
        $region66: #{tpu_custom_call.1} parent=11 // pred_check_branch
          %603 = sbr.rel (%p601) target = $region68
        $region67: #{tpu_custom_call.1} parent=11 // pred_region
          %s605 = ssub.s32 16, 16
          %606 = vsyncadd [#allocation24], %s605
          %s608 = sshll.u32 [#allocation25], 4
          %s609 = int_to_ptr.vmem [resolvable:$true] %s608
          %611 = dma.hbm_to_vmem [thread:$0]  %s14, 16, %s609, [#allocation24]
        $region68: #{tpu_custom_call.1} parent=11 // pred_fallthru
          _
        // Predicated region
        $region69: #{tpu_custom_call.1} parent=11 // pred_check
          %p612 = pneg %p378
        $region70: #{tpu_custom_call.1} parent=11 // pred_check_branch
          %614 = sbr.rel (%p612) target = $region72
        $region71: #{tpu_custom_call.1} parent=11 // pred_region
          %s616 = ssub.s32 16, 16
          %617 = vsyncadd [#allocation27], %s616
          %s619 = sshll.u32 [#allocation26], 4
          %s620 = int_to_ptr.vmem [resolvable:$true] %s619
          %622 = dma.hbm_to_vmem [thread:$0]  %s15, 16, %s620, [#allocation27]
        $region72: #{tpu_custom_call.1} parent=11 // pred_fallthru
          _
        // Predicated region
        $region73: #{tpu_custom_call.1} parent=11 // pred_check
          %p623 = pneg %p399
        $region74: #{tpu_custom_call.1} parent=11 // pred_check_branch
          %625 = sbr.rel (%p623) target = $region76
        $region75: #{tpu_custom_call.1} parent=11 // pred_region
          %s627 = ssub.s32 16, 16
          %628 = vsyncadd [#allocation27], %s627
          %s630 = sshll.u32 [#allocation28], 4
          %s631 = int_to_ptr.vmem [resolvable:$true] %s630
          %633 = dma.hbm_to_vmem [thread:$0]  %s16, 16, %s631, [#allocation27]
        $region76: #{tpu_custom_call.1} parent=11 // pred_fallthru
          _
      $region12: #{tpu_custom_call.1} parent=5 // pred_fallthru
        _
      %p634 = scmp.lt.s32.totalorder %s37, 2
      // Predicated region
      $region77: #{tpu_custom_call.1} parent=5 // pred_check
        %p635 = pneg %p634
      $region78: #{tpu_custom_call.1} parent=5 // pred_check_branch
        %637 = sbr.rel (%p635) target = $region80
      $region79: #{tpu_custom_call.1} parent=5 // pred_region
        // Predicated region
        $region81: #{tpu_custom_call.1} parent=79 // pred_check
          %p638 = pneg %p57
        $region82: #{tpu_custom_call.1} parent=79 // pred_check_branch
          %640 = sbr.rel (%p638) target = $region84
        $region83: #{tpu_custom_call.1} parent=79 // pred_region
          %s641 = sand.u32 %s47, 1
          %s642 = scalar_lea.sflag [#allocation3], %s641
          %s643 = sand.u32 %s47, 1
          %s644 = smul.addr %s643, 8
          %s645 = scalar_lea.vmem [#allocation2], %s644
          %s647 = ssub.s32 128, 128
          %648 = vsyncadd %s642, %s647
          %s649 = smul.addr %s37, 128
          %s650 = scalar_lea.hbm %s0, %s649
          %s652 = sshll.u32 %s645, 4
          %s653 = int_to_ptr.vmem [resolvable:$true] %s652
          %655 = dma.hbm_to_vmem [thread:$0]  %s650, 128, %s653, %s642
        $region84: #{tpu_custom_call.1} parent=79 // pred_fallthru
          _
      $region80: #{tpu_custom_call.1} parent=5 // pred_fallthru
        _
      %p656 = scmp.le.s32.totalorder 1, %s37
      %p657 = scmp.lt.s32.totalorder %s37, 3
      %p658 = pnand %p656, %p657
      %p659 = pneg %p658
      // Predicated region
      $region85: #{tpu_custom_call.1} parent=5 // pred_check
        _
      $region86: #{tpu_custom_call.1} parent=5 // pred_check_branch
        %661 = sbr.rel (%p658) target = $region88
      $region87: #{tpu_custom_call.1} parent=5 // pred_region
        %s662 = ssub.s32 %s37, 1
        %s663 = sand.u32 %s50, 1
        %s664 = scalar_lea.sflag [#allocation3], %s663
        %s665 = sand.u32 %s50, 1
        %s666 = smul.addr %s665, 8
        %s667 = scalar_lea.vmem [#allocation2], %s666
        // Predicated region
        $region89: #{tpu_custom_call.1} parent=87 // pred_check
          %p668 = pneg %p63
        $region90: #{tpu_custom_call.1} parent=87 // pred_check_branch
          %670 = sbr.rel (%p668) target = $region92
        $region91: #{tpu_custom_call.1} parent=87 // pred_region
          %671 = dma.done %s664, 128
        $region92: #{tpu_custom_call.1} parent=87 // pred_fallthru
          _
        // Predicated region
        $region93: #{tpu_custom_call.1} parent=87 // pred_check
          %p672 = pneg %p84
        $region94: #{tpu_custom_call.1} parent=87 // pred_check_branch
          %674 = sbr.rel (%p672) target = $region96
        $region95: #{tpu_custom_call.1} parent=87 // pred_region
          %675 = dma.done [#allocation6], 1024
        $region96: #{tpu_custom_call.1} parent=87 // pred_fallthru
          _
        // Predicated region
        $region97: #{tpu_custom_call.1} parent=87 // pred_check
          %p676 = pneg %p105
        $region98: #{tpu_custom_call.1} parent=87 // pred_check_branch
          %678 = sbr.rel (%p676) target = $region100
        $region99: #{tpu_custom_call.1} parent=87 // pred_region
          %679 = dma.done [#allocation6], 64
        $region100: #{tpu_custom_call.1} parent=87 // pred_fallthru
          _
        // Predicated region
        $region101: #{tpu_custom_call.1} parent=87 // pred_check
          %p680 = pneg %p126
        $region102: #{tpu_custom_call.1} parent=87 // pred_check_branch
          %682 = sbr.rel (%p680) target = $region104
        $region103: #{tpu_custom_call.1} parent=87 // pred_region
          %683 = dma.done [#allocation9], 1024
        $region104: #{tpu_custom_call.1} parent=87 // pred_fallthru
          _
        // Predicated region
        $region105: #{tpu_custom_call.1} parent=87 // pred_check
          %p684 = pneg %p147
        $region106: #{tpu_custom_call.1} parent=87 // pred_check_branch
          %686 = sbr.rel (%p684) target = $region108
        $region107: #{tpu_custom_call.1} parent=87 // pred_region
          %687 = dma.done [#allocation9], 64
        $region108: #{tpu_custom_call.1} parent=87 // pred_fallthru
          _
        // Predicated region
        $region109: #{tpu_custom_call.1} parent=87 // pred_check
          %p688 = pneg %p168
        $region110: #{tpu_custom_call.1} parent=87 // pred_check_branch
          %690 = sbr.rel (%p688) target = $region112
        $region111: #{tpu_custom_call.1} parent=87 // pred_region
          %691 = dma.done [#allocation12], 1024
        $region112: #{tpu_custom_call.1} parent=87 // pred_fallthru
          _
        // Predicated region
        $region113: #{tpu_custom_call.1} parent=87 // pred_check
          %p692 = pneg %p189
        $region114: #{tpu_custom_call.1} parent=87 // pred_check_branch
          %694 = sbr.rel (%p692) target = $region116
        $region115: #{tpu_custom_call.1} parent=87 // pred_region
          %695 = dma.done [#allocation12], 64
        $region116: #{tpu_custom_call.1} parent=87 // pred_fallthru
          _
        // Predicated region
        $region117: #{tpu_custom_call.1} parent=87 // pred_check
          %p696 = pneg %p210
        $region118: #{tpu_custom_call.1} parent=87 // pred_check_branch
          %698 = sbr.rel (%p696) target = $region120
        $region119: #{tpu_custom_call.1} parent=87 // pred_region
          %699 = dma.done [#allocation15], 256
        $region120: #{tpu_custom_call.1} parent=87 // pred_fallthru
          _
        // Predicated region
        $region121: #{tpu_custom_call.1} parent=87 // pred_check
          %p700 = pneg %p231
        $region122: #{tpu_custom_call.1} parent=87 // pred_check_branch
          %702 = sbr.rel (%p700) target = $region124
        $region123: #{tpu_custom_call.1} parent=87 // pred_region
          %703 = dma.done [#allocation15], 16
        $region124: #{tpu_custom_call.1} parent=87 // pred_fallthru
          _
        // Predicated region
        $region125: #{tpu_custom_call.1} parent=87 // pred_check
          %p704 = pneg %p252
        $region126: #{tpu_custom_call.1} parent=87 // pred_check_branch
          %706 = sbr.rel (%p704) target = $region128
        $region127: #{tpu_custom_call.1} parent=87 // pred_region
          %707 = dma.done [#allocation18], 16
        $region128: #{tpu_custom_call.1} parent=87 // pred_fallthru
          _
        // Predicated region
        $region129: #{tpu_custom_call.1} parent=87 // pred_check
          %p708 = pneg %p273
        $region130: #{tpu_custom_call.1} parent=87 // pred_check_branch
          %710 = sbr.rel (%p708) target = $region132
        $region131: #{tpu_custom_call.1} parent=87 // pred_region
          %711 = dma.done [#allocation18], 16
        $region132: #{tpu_custom_call.1} parent=87 // pred_fallthru
          _
        // Predicated region
        $region133: #{tpu_custom_call.1} parent=87 // pred_check
          %p712 = pneg %p294
        $region134: #{tpu_custom_call.1} parent=87 // pred_check_branch
          %714 = sbr.rel (%p712) target = $region136
        $region135: #{tpu_custom_call.1} parent=87 // pred_region
          %715 = dma.done [#allocation21], 256
        $region136: #{tpu_custom_call.1} parent=87 // pred_fallthru
          _
        // Predicated region
        $region137: #{tpu_custom_call.1} parent=87 // pred_check
          %p716 = pneg %p315
        $region138: #{tpu_custom_call.1} parent=87 // pred_check_branch
          %718 = sbr.rel (%p716) target = $region140
        $region139: #{tpu_custom_call.1} parent=87 // pred_region
          %719 = dma.done [#allocation21], 16
        $region140: #{tpu_custom_call.1} parent=87 // pred_fallthru
          _
        // Predicated region
        $region141: #{tpu_custom_call.1} parent=87 // pred_check
          %p720 = pneg %p336
        $region142: #{tpu_custom_call.1} parent=87 // pred_check_branch
          %722 = sbr.rel (%p720) target = $region144
        $region143: #{tpu_custom_call.1} parent=87 // pred_region
          %723 = dma.done [#allocation24], 512
        $region144: #{tpu_custom_call.1} parent=87 // pred_fallthru
          _
        // Predicated region
        $region145: #{tpu_custom_call.1} parent=87 // pred_check
          %p724 = pneg %p357
        $region146: #{tpu_custom_call.1} parent=87 // pred_check_branch
          %726 = sbr.rel (%p724) target = $region148
        $region147: #{tpu_custom_call.1} parent=87 // pred_region
          %727 = dma.done [#allocation24], 16
        $region148: #{tpu_custom_call.1} parent=87 // pred_fallthru
          _
        // Predicated region
        $region149: #{tpu_custom_call.1} parent=87 // pred_check
          %p728 = pneg %p378
        $region150: #{tpu_custom_call.1} parent=87 // pred_check_branch
          %730 = sbr.rel (%p728) target = $region152
        $region151: #{tpu_custom_call.1} parent=87 // pred_region
          %731 = dma.done [#allocation27], 16
        $region152: #{tpu_custom_call.1} parent=87 // pred_fallthru
          _
        // Predicated region
        $region153: #{tpu_custom_call.1} parent=87 // pred_check
          %p732 = pneg %p399
        $region154: #{tpu_custom_call.1} parent=87 // pred_check_branch
          %734 = sbr.rel (%p732) target = $region156
        $region155: #{tpu_custom_call.1} parent=87 // pred_region
          %735 = dma.done [#allocation27], 16
        $region156: #{tpu_custom_call.1} parent=87 // pred_fallthru
          _
        %s736 = sand.u32 %s50, 1
        %s737 = scalar_lea.sflag [#allocation3], %s736
        %s738 = sand.u32 %s50, 1
        %s739 = smul.addr %s738, 8
        %s740 = scalar_lea.vmem [#allocation2], %s739
        %p741 = pneg %p63
        %p742 = pneg %p60
        %p743 = pneg %p84
        %p744 = pneg %p81
        %p745 = pneg %p105
        %p746 = pneg %p102
        %p747 = pneg %p126
        %p748 = pneg %p123
        %p749 = pneg %p147
        %p750 = pneg %p144
        %p751 = pneg %p168
        %p752 = pneg %p165
        %p753 = pneg %p189
        %p754 = pneg %p186
        %p755 = pneg %p210
        %p756 = pneg %p207
        %p757 = pneg %p231
        %p758 = pneg %p228
        %p759 = pneg %p252
        %p760 = pneg %p249
        %p761 = pneg %p273
        %p762 = pneg %p270
        %p763 = pneg %p294
        %p764 = pneg %p291
        %p765 = pneg %p315
        %p766 = pneg %p312
        %p767 = pneg %p336
        %p768 = pneg %p333
        %p769 = pneg %p357
        %p770 = pneg %p354
        %p771 = pneg %p378
        %p772 = pneg %p375
        %p773 = pneg %p399
        %p774 = pneg %p396
        %p775 = pneg %p425
        %p776 = pneg %p422
        %s777 = sand.u32 %s412, 1
        %s778 = scalar_lea.sflag [#allocation4], %s777
        %s779 = sand.u32 %s412, 1
        %s780 = smul.addr %s779, 8
        %s781 = scalar_lea.vmem [#allocation29], %s780
        %v783 = vld [vmem:[%s667] sm:$0xff]
        %v784 = vpack.c.bf16 %v783, %v783
        %v785 = vld [vmem:[#allocation5] sm:$0xf]
        %v786 = vld [vmem:[#allocation5 + $0x4] sm:$0xf]
        %v787 = vld [vmem:[#allocation5 + $0x8] sm:$0xf]
        %v788 = vld [vmem:[#allocation5 + $0xc] sm:$0xf]
        %v789 = vld [vmem:[#allocation5 + $0x10] sm:$0xf]
        %v790 = vld [vmem:[#allocation5 + $0x14] sm:$0xf]
        %v791 = vld [vmem:[#allocation5 + $0x18] sm:$0xf]
        %v792 = vld [vmem:[#allocation5 + $0x1c] sm:$0xf]
        %v793 = vld [vmem:[#allocation5 + $0x20] sm:$0xf]
        %v794 = vld [vmem:[#allocation5 + $0x24] sm:$0xf]
        %v795 = vld [vmem:[#allocation5 + $0x28] sm:$0xf]
        %v796 = vld [vmem:[#allocation5 + $0x2c] sm:$0xf]
        %v797 = vld [vmem:[#allocation5 + $0x30] sm:$0xf]
        %v798 = vld [vmem:[#allocation5 + $0x34] sm:$0xf]
        %v799 = vld [vmem:[#allocation5 + $0x38] sm:$0xf]
        %v800 = vld [vmem:[#allocation5 + $0x3c] sm:$0xf]
        %v801 = vld [vmem:[#allocation8] sm:$0xf]
        %v802 = vld [vmem:[#allocation8 + $0x4] sm:$0xf]
        %v803 = vld [vmem:[#allocation8 + $0x8] sm:$0xf]
        %v804 = vld [vmem:[#allocation8 + $0xc] sm:$0xf]
        %v805 = vld [vmem:[#allocation8 + $0x10] sm:$0xf]
        %v806 = vld [vmem:[#allocation8 + $0x14] sm:$0xf]
        %v807 = vld [vmem:[#allocation8 + $0x18] sm:$0xf]
        %v808 = vld [vmem:[#allocation8 + $0x1c] sm:$0xf]
        %v809 = vld [vmem:[#allocation8 + $0x20] sm:$0xf]
        %v810 = vld [vmem:[#allocation8 + $0x24] sm:$0xf]
        %v811 = vld [vmem:[#allocation8 + $0x28] sm:$0xf]
        %v812 = vld [vmem:[#allocation8 + $0x2c] sm:$0xf]
        %v813 = vld [vmem:[#allocation8 + $0x30] sm:$0xf]
        %v814 = vld [vmem:[#allocation8 + $0x34] sm:$0xf]
        %v815 = vld [vmem:[#allocation8 + $0x38] sm:$0xf]
        %v816 = vld [vmem:[#allocation8 + $0x3c] sm:$0xf]
        %v817 = vld [vmem:[#allocation11] sm:$0xf]
        %v818 = vld [vmem:[#allocation11 + $0x4] sm:$0xf]
        %v819 = vld [vmem:[#allocation11 + $0x8] sm:$0xf]
        %v820 = vld [vmem:[#allocation11 + $0xc] sm:$0xf]
        %v821 = vld [vmem:[#allocation11 + $0x10] sm:$0xf]
        %v822 = vld [vmem:[#allocation11 + $0x14] sm:$0xf]
        %v823 = vld [vmem:[#allocation11 + $0x18] sm:$0xf]
        %v824 = vld [vmem:[#allocation11 + $0x1c] sm:$0xf]
        %v825 = vld [vmem:[#allocation11 + $0x20] sm:$0xf]
        %v826 = vld [vmem:[#allocation11 + $0x24] sm:$0xf]
        %v827 = vld [vmem:[#allocation11 + $0x28] sm:$0xf]
        %v828 = vld [vmem:[#allocation11 + $0x2c] sm:$0xf]
        %v829 = vld [vmem:[#allocation11 + $0x30] sm:$0xf]
        %v830 = vld [vmem:[#allocation11 + $0x34] sm:$0xf]
        %v831 = vld [vmem:[#allocation11 + $0x38] sm:$0xf]
        %v832 = vld [vmem:[#allocation11 + $0x3c] sm:$0xf]
        %v833 = vld [vmem:[#allocation7] sm:$0x1]
        %v834 = vld [vmem:[#allocation7 + $0x1] sm:$0x1]
        %v835 = vld [vmem:[#allocation7 + $0x2] sm:$0x1]
        %v836 = vld [vmem:[#allocation7 + $0x3] sm:$0x1]
        %v841 = vlaneseq
        %v842 = vshrl.u32 %v841, 7
        %v843 = vsub.s32 0, %v842
        %v844 = vrot.slane %v833, %v843
        %v845 = vlaneseq
        %v846 = vshrl.u32 %v845, 7
        %v847 = vsub.s32 0, %v846
        %v848 = vrot.slane %v834, %v847
        %v849 = vlaneseq
        %v850 = vshrl.u32 %v849, 7
        %v851 = vsub.s32 0, %v850
        %v852 = vrot.slane %v835, %v851
        %v853 = vlaneseq
        %v854 = vshrl.u32 %v853, 7
        %v855 = vsub.s32 0, %v854
        %v856 = vrot.slane %v836, %v855
        %v865 = vunpack.c.l.b16 %v785
        %v866 = vunpack.c.l.b16 %v786
        %v867 = vunpack.c.l.b16 %v787
        %v868 = vunpack.c.l.b16 %v788
        %v869 = vpack.c.b16 %v866, %v865
        %v870 = vpack.c.b16 %v868, %v867
        %vm873 = vcmask 261120
        %v875 = vsel %vm873, %v784, 0
        %877 = vmatprep.subr.bf16.mxu0 0
        %878 = vmatpush1.bf16.msra.mxu0 %v869
        %879 = vmatprep.subr.bf16.mxu0 0
        %880 = vmatpush1.bf16.msra.mxu0 %v870
        %881 = vmatprep.subr.bf16.mxu0 0
        %882 = vmatpush1.bf16.msra.mxu0 0
        %883 = vmatprep.subr.bf16.mxu0 0
        %884 = vmatpush1.bf16.msra.mxu0 0
        %885 = vmatprep.subr.bf16.mxu0 0
        %886 = vmatpush1.bf16.msra.mxu0 0
        %887 = vmatprep.subr.bf16.mxu0 0
        %888 = vmatpush1.bf16.msra.mxu0 0
        %889 = vmatprep.subr.bf16.mxu0 0
        %890 = vmatpush1.bf16.msra.mxu0 0
        %891 = vmatprep.subr.bf16.mxu0 0
        %892 = vmatpush1.bf16.msra.mxu0 0
        %893 = vmatprep.subr.bf16.mxu0 0
        %894 = vmatpush1.bf16.msra.mxu0 0
        %895 = vmatprep.subr.bf16.mxu0 0
        %896 = vmatpush1.bf16.msra.mxu0 0
        %897 = vmatprep.subr.bf16.mxu0 0
        %898 = vmatpush1.bf16.msra.mxu0 0
        %899 = vmatprep.subr.bf16.mxu0 0
        %900 = vmatpush1.bf16.msra.mxu0 0
        %901 = vmatprep.subr.bf16.mxu0 0
        %902 = vmatpush1.bf16.msra.mxu0 0
        %903 = vmatprep.subr.bf16.mxu0 0
        %904 = vmatpush1.bf16.msra.mxu0 0
        %905 = vmatprep.subr.bf16.mxu0 0
        %906 = vmatpush1.bf16.msra.mxu0 0
        %907 = vmatprep.subr.bf16.mxu0 0
        %908 = vmatpush1.bf16.msra.mxu0 0
        %909 = vmatprep.mubr.bf16.mxu0 0
        %910 = vmatmul.mubr.bf16.gmra.mrb[0].mxu0 %v875
        %v911 = vpop.f32.mrb[0].mxu0
        %v912 = vadd.f32 %v844, %v911
        %v913 = vpop.f32.mrb[0].mxu0
        %v914 = vpop.f32.mrb[0].mxu0
        %v915 = vpop.f32.mrb[0].mxu0
        %916 = vdwg.mxu0
        %v921 = vunpack.c.l.b16 %v789
        %v922 = vunpack.c.l.b16 %v790
        %v923 = vunpack.c.l.b16 %v791
        %v924 = vunpack.c.l.b16 %v792
        %v925 = vpack.c.b16 %v922, %v921
        %v926 = vpack.c.b16 %v924, %v923
        %929 = vmatprep.subr.bf16.mxu0 0
        %930 = vmatpush1.bf16.msra.mxu0 %v925
        %931 = vmatprep.subr.bf16.mxu0 0
        %932 = vmatpush1.bf16.msra.mxu0 %v926
        %933 = vmatprep.subr.bf16.mxu0 0
        %934 = vmatpush1.bf16.msra.mxu0 0
        %935 = vmatprep.subr.bf16.mxu0 0
        %936 = vmatpush1.bf16.msra.mxu0 0
        %937 = vmatprep.subr.bf16.mxu0 0
        %938 = vmatpush1.bf16.msra.mxu0 0
        %939 = vmatprep.subr.bf16.mxu0 0
        %940 = vmatpush1.bf16.msra.mxu0 0
        %941 = vmatprep.subr.bf16.mxu0 0
        %942 = vmatpush1.bf16.msra.mxu0 0
        %943 = vmatprep.subr.bf16.mxu0 0
        %944 = vmatpush1.bf16.msra.mxu0 0
        %945 = vmatprep.subr.bf16.mxu0 0
        %946 = vmatpush1.bf16.msra.mxu0 0
        %947 = vmatprep.subr.bf16.mxu0 0
        %948 = vmatpush1.bf16.msra.mxu0 0
        %949 = vmatprep.subr.bf16.mxu0 0
        %950 = vmatpush1.bf16.msra.mxu0 0
        %951 = vmatprep.subr.bf16.mxu0 0
        %952 = vmatpush1.bf16.msra.mxu0 0
        %953 = vmatprep.subr.bf16.mxu0 0
        %954 = vmatpush1.bf16.msra.mxu0 0
        %955 = vmatprep.subr.bf16.mxu0 0
        %956 = vmatpush1.bf16.msra.mxu0 0
        %957 = vmatprep.subr.bf16.mxu0 0
        %958 = vmatpush1.bf16.msra.mxu0 0
        %959 = vmatprep.subr.bf16.mxu0 0
        %960 = vmatpush1.bf16.msra.mxu0 0
        %961 = vmatprep.mubr.bf16.mxu0 0
        %962 = vmatmul.mubr.bf16.gmra.mrb[0].mxu0 %v875
        %v963 = vpop.f32.mrb[0].mxu0
        %v964 = vadd.f32 %v848, %v963
        %v965 = vpop.f32.mrb[0].mxu0
        %v966 = vpop.f32.mrb[0].mxu0
        %v967 = vpop.f32.mrb[0].mxu0
        %968 = vdwg.mxu0
        %v973 = vunpack.c.l.b16 %v793
        %v974 = vunpack.c.l.b16 %v794
        %v975 = vunpack.c.l.b16 %v795
        %v976 = vunpack.c.l.b16 %v796
        %v977 = vpack.c.b16 %v974, %v973
        %v978 = vpack.c.b16 %v976, %v975
        %981 = vmatprep.subr.bf16.mxu0 0
        %982 = vmatpush1.bf16.msra.mxu0 %v977
        %983 = vmatprep.subr.bf16.mxu0 0
        %984 = vmatpush1.bf16.msra.mxu0 %v978
        %985 = vmatprep.subr.bf16.mxu0 0
        %986 = vmatpush1.bf16.msra.mxu0 0
        %987 = vmatprep.subr.bf16.mxu0 0
        %988 = vmatpush1.bf16.msra.mxu0 0
        %989 = vmatprep.subr.bf16.mxu0 0
        %990 = vmatpush1.bf16.msra.mxu0 0
        %991 = vmatprep.subr.bf16.mxu0 0
        %992 = vmatpush1.bf16.msra.mxu0 0
        %993 = vmatprep.subr.bf16.mxu0 0
        %994 = vmatpush1.bf16.msra.mxu0 0
        %995 = vmatprep.subr.bf16.mxu0 0
        %996 = vmatpush1.bf16.msra.mxu0 0
        %997 = vmatprep.subr.bf16.mxu0 0
        %998 = vmatpush1.bf16.msra.mxu0 0
        %999 = vmatprep.subr.bf16.mxu0 0
        %1000 = vmatpush1.bf16.msra.mxu0 0
        %1001 = vmatprep.subr.bf16.mxu0 0
        %1002 = vmatpush1.bf16.msra.mxu0 0
        %1003 = vmatprep.subr.bf16.mxu0 0
        %1004 = vmatpush1.bf16.msra.mxu0 0
        %1005 = vmatprep.subr.bf16.mxu0 0
        %1006 = vmatpush1.bf16.msra.mxu0 0
        %1007 = vmatprep.subr.bf16.mxu0 0
        %1008 = vmatpush1.bf16.msra.mxu0 0
        %1009 = vmatprep.subr.bf16.mxu0 0
        %1010 = vmatpush1.bf16.msra.mxu0 0
        %1011 = vmatprep.subr.bf16.mxu0 0
        %1012 = vmatpush1.bf16.msra.mxu0 0
        %1013 = vmatprep.mubr.bf16.mxu0 0
        %1014 = vmatmul.mubr.bf16.gmra.mrb[0].mxu0 %v875
        %v1015 = vpop.f32.mrb[0].mxu0
        %v1016 = vadd.f32 %v852, %v1015
        %v1017 = vpop.f32.mrb[0].mxu0
        %v1018 = vpop.f32.mrb[0].mxu0
        %v1019 = vpop.f32.mrb[0].mxu0
        %1020 = vdwg.mxu0
        %v1025 = vunpack.c.l.b16 %v797
        %v1026 = vunpack.c.l.b16 %v798
        %v1027 = vunpack.c.l.b16 %v799
        %v1028 = vunpack.c.l.b16 %v800
        %v1029 = vpack.c.b16 %v1026, %v1025
        %v1030 = vpack.c.b16 %v1028, %v1027
        %1033 = vmatprep.subr.bf16.mxu0 0
        %1034 = vmatpush1.bf16.msra.mxu0 %v1029
        %1035 = vmatprep.subr.bf16.mxu0 0
        %1036 = vmatpush1.bf16.msra.mxu0 %v1030
        %1037 = vmatprep.subr.bf16.mxu0 0
        %1038 = vmatpush1.bf16.msra.mxu0 0
        %1039 = vmatprep.subr.bf16.mxu0 0
        %1040 = vmatpush1.bf16.msra.mxu0 0
        %1041 = vmatprep.subr.bf16.mxu0 0
        %1042 = vmatpush1.bf16.msra.mxu0 0
        %1043 = vmatprep.subr.bf16.mxu0 0
        %1044 = vmatpush1.bf16.msra.mxu0 0
        %1045 = vmatprep.subr.bf16.mxu0 0
        %1046 = vmatpush1.bf16.msra.mxu0 0
        %1047 = vmatprep.subr.bf16.mxu0 0
        %1048 = vmatpush1.bf16.msra.mxu0 0
        %1049 = vmatprep.subr.bf16.mxu0 0
        %1050 = vmatpush1.bf16.msra.mxu0 0
        %1051 = vmatprep.subr.bf16.mxu0 0
        %1052 = vmatpush1.bf16.msra.mxu0 0
        %1053 = vmatprep.subr.bf16.mxu0 0
        %1054 = vmatpush1.bf16.msra.mxu0 0
        %1055 = vmatprep.subr.bf16.mxu0 0
        %1056 = vmatpush1.bf16.msra.mxu0 0
        %1057 = vmatprep.subr.bf16.mxu0 0
        %1058 = vmatpush1.bf16.msra.mxu0 0
        %1059 = vmatprep.subr.bf16.mxu0 0
        %1060 = vmatpush1.bf16.msra.mxu0 0
        %1061 = vmatprep.subr.bf16.mxu0 0
        %1062 = vmatpush1.bf16.msra.mxu0 0
        %1063 = vmatprep.subr.bf16.mxu0 0
        %1064 = vmatpush1.bf16.msra.mxu0 0
        %1065 = vmatprep.mubr.bf16.mxu0 0
        %1066 = vmatmul.mubr.bf16.gmra.mrb[0].mxu0 %v875
        %v1067 = vpop.f32.mrb[0].mxu0
        %v1068 = vadd.f32 %v856, %v1067
        %v1069 = vpop.f32.mrb[0].mxu0
        %v1070 = vpop.f32.mrb[0].mxu0
        %v1071 = vpop.f32.mrb[0].mxu0
        %1072 = vdwg.mxu0
        %v1073 = vmul.f32 %v912, 0.35355338
        %v1074 = vmul.f32 %v964, 0.35355338
        %v1075 = vmul.f32 %v1016, 0.35355338
        %v1076 = vmul.f32 %v1068, 0.35355338
        %v1077 = vld [vmem:[#allocation10] sm:$0x1]
        %v1078 = vld [vmem:[#allocation10 + $0x1] sm:$0x1]
        %v1079 = vld [vmem:[#allocation10 + $0x2] sm:$0x1]
        %v1080 = vld [vmem:[#allocation10 + $0x3] sm:$0x1]
        %v1085 = vlaneseq
        %v1086 = vshrl.u32 %v1085, 7
        %v1087 = vsub.s32 0, %v1086
        %v1088 = vrot.slane %v1077, %v1087
        %v1089 = vlaneseq
        %v1090 = vshrl.u32 %v1089, 7
        %v1091 = vsub.s32 0, %v1090
        %v1092 = vrot.slane %v1078, %v1091
        %v1093 = vlaneseq
        %v1094 = vshrl.u32 %v1093, 7
        %v1095 = vsub.s32 0, %v1094
        %v1096 = vrot.slane %v1079, %v1095
        %v1097 = vlaneseq
        %v1098 = vshrl.u32 %v1097, 7
        %v1099 = vsub.s32 0, %v1098
        %v1100 = vrot.slane %v1080, %v1099
        %v1109 = vunpack.c.l.b16 %v801
        %v1110 = vunpack.c.l.b16 %v802
        %v1111 = vunpack.c.l.b16 %v803
        %v1112 = vunpack.c.l.b16 %v804
        %v1113 = vpack.c.b16 %v1110, %v1109
        %v1114 = vpack.c.b16 %v1112, %v1111
        %1117 = vmatprep.subr.bf16.mxu0 0
        %1118 = vmatpush1.bf16.msra.mxu0 %v1113
        %1119 = vmatprep.subr.bf16.mxu0 0
        %1120 = vmatpush1.bf16.msra.mxu0 %v1114
        %1121 = vmatprep.subr.bf16.mxu0 0
        %1122 = vmatpush1.bf16.msra.mxu0 0
        %1123 = vmatprep.subr.bf16.mxu0 0
        %1124 = vmatpush1.bf16.msra.mxu0 0
        %1125 = vmatprep.subr.bf16.mxu0 0
        %1126 = vmatpush1.bf16.msra.mxu0 0
        %1127 = vmatprep.subr.bf16.mxu0 0
        %1128 = vmatpush1.bf16.msra.mxu0 0
        %1129 = vmatprep.subr.bf16.mxu0 0
        %1130 = vmatpush1.bf16.msra.mxu0 0
        %1131 = vmatprep.subr.bf16.mxu0 0
        %1132 = vmatpush1.bf16.msra.mxu0 0
        %1133 = vmatprep.subr.bf16.mxu0 0
        %1134 = vmatpush1.bf16.msra.mxu0 0
        %1135 = vmatprep.subr.bf16.mxu0 0
        %1136 = vmatpush1.bf16.msra.mxu0 0
        %1137 = vmatprep.subr.bf16.mxu0 0
        %1138 = vmatpush1.bf16.msra.mxu0 0
        %1139 = vmatprep.subr.bf16.mxu0 0
        %1140 = vmatpush1.bf16.msra.mxu0 0
        %1141 = vmatprep.subr.bf16.mxu0 0
        %1142 = vmatpush1.bf16.msra.mxu0 0
        %1143 = vmatprep.subr.bf16.mxu0 0
        %1144 = vmatpush1.bf16.msra.mxu0 0
        %1145 = vmatprep.subr.bf16.mxu0 0
        %1146 = vmatpush1.bf16.msra.mxu0 0
        %1147 = vmatprep.subr.bf16.mxu0 0
        %1148 = vmatpush1.bf16.msra.mxu0 0
        %1149 = vmatprep.mubr.bf16.mxu0 0
        %1150 = vmatmul.mubr.bf16.gmra.mrb[0].mxu0 %v875
        %v1151 = vpop.f32.mrb[0].mxu0
        %v1152 = vadd.f32 %v1088, %v1151
        %v1153 = vpop.f32.mrb[0].mxu0
        %v1154 = vpop.f32.mrb[0].mxu0
        %v1155 = vpop.f32.mrb[0].mxu0
        %1156 = vdwg.mxu0
        %v1161 = vunpack.c.l.b16 %v805
        %v1162 = vunpack.c.l.b16 %v806
        %v1163 = vunpack.c.l.b16 %v807
        %v1164 = vunpack.c.l.b16 %v808
        %v1165 = vpack.c.b16 %v1162, %v1161
        %v1166 = vpack.c.b16 %v1164, %v1163
        %1169 = vmatprep.subr.bf16.mxu0 0
        %1170 = vmatpush1.bf16.msra.mxu0 %v1165
        %1171 = vmatprep.subr.bf16.mxu0 0
        %1172 = vmatpush1.bf16.msra.mxu0 %v1166
        %1173 = vmatprep.subr.bf16.mxu0 0
        %1174 = vmatpush1.bf16.msra.mxu0 0
        %1175 = vmatprep.subr.bf16.mxu0 0
        %1176 = vmatpush1.bf16.msra.mxu0 0
        %1177 = vmatprep.subr.bf16.mxu0 0
        %1178 = vmatpush1.bf16.msra.mxu0 0
        %1179 = vmatprep.subr.bf16.mxu0 0
        %1180 = vmatpush1.bf16.msra.mxu0 0
        %1181 = vmatprep.subr.bf16.mxu0 0
        %1182 = vmatpush1.bf16.msra.mxu0 0
        %1183 = vmatprep.subr.bf16.mxu0 0
        %1184 = vmatpush1.bf16.msra.mxu0 0
        %1185 = vmatprep.subr.bf16.mxu0 0
        %1186 = vmatpush1.bf16.msra.mxu0 0
        %1187 = vmatprep.subr.bf16.mxu0 0
        %1188 = vmatpush1.bf16.msra.mxu0 0
        %1189 = vmatprep.subr.bf16.mxu0 0
        %1190 = vmatpush1.bf16.msra.mxu0 0
        %1191 = vmatprep.subr.bf16.mxu0 0
        %1192 = vmatpush1.bf16.msra.mxu0 0
        %1193 = vmatprep.subr.bf16.mxu0 0
        %1194 = vmatpush1.bf16.msra.mxu0 0
        %1195 = vmatprep.subr.bf16.mxu0 0
        %1196 = vmatpush1.bf16.msra.mxu0 0
        %1197 = vmatprep.subr.bf16.mxu0 0
        %1198 = vmatpush1.bf16.msra.mxu0 0
        %1199 = vmatprep.subr.bf16.mxu0 0
        %1200 = vmatpush1.bf16.msra.mxu0 0
        %1201 = vmatprep.mubr.bf16.mxu0 0
        %1202 = vmatmul.mubr.bf16.gmra.mrb[0].mxu0 %v875
        %v1203 = vpop.f32.mrb[0].mxu0
        %v1204 = vadd.f32 %v1092, %v1203
        %v1205 = vpop.f32.mrb[0].mxu0
        %v1206 = vpop.f32.mrb[0].mxu0
        %v1207 = vpop.f32.mrb[0].mxu0
        %1208 = vdwg.mxu0
        %v1213 = vunpack.c.l.b16 %v809
        %v1214 = vunpack.c.l.b16 %v810
        %v1215 = vunpack.c.l.b16 %v811
        %v1216 = vunpack.c.l.b16 %v812
        %v1217 = vpack.c.b16 %v1214, %v1213
        %v1218 = vpack.c.b16 %v1216, %v1215
        %1221 = vmatprep.subr.bf16.mxu0 0
        %1222 = vmatpush1.bf16.msra.mxu0 %v1217
        %1223 = vmatprep.subr.bf16.mxu0 0
        %1224 = vmatpush1.bf16.msra.mxu0 %v1218
        %1225 = vmatprep.subr.bf16.mxu0 0
        %1226 = vmatpush1.bf16.msra.mxu0 0
        %1227 = vmatprep.subr.bf16.mxu0 0
        %1228 = vmatpush1.bf16.msra.mxu0 0
        %1229 = vmatprep.subr.bf16.mxu0 0
        %1230 = vmatpush1.bf16.msra.mxu0 0
        %1231 = vmatprep.subr.bf16.mxu0 0
        %1232 = vmatpush1.bf16.msra.mxu0 0
        %1233 = vmatprep.subr.bf16.mxu0 0
        %1234 = vmatpush1.bf16.msra.mxu0 0
        %1235 = vmatprep.subr.bf16.mxu0 0
        %1236 = vmatpush1.bf16.msra.mxu0 0
        %1237 = vmatprep.subr.bf16.mxu0 0
        %1238 = vmatpush1.bf16.msra.mxu0 0
        %1239 = vmatprep.subr.bf16.mxu0 0
        %1240 = vmatpush1.bf16.msra.mxu0 0
        %1241 = vmatprep.subr.bf16.mxu0 0
        %1242 = vmatpush1.bf16.msra.mxu0 0
        %1243 = vmatprep.subr.bf16.mxu0 0
        %1244 = vmatpush1.bf16.msra.mxu0 0
        %1245 = vmatprep.subr.bf16.mxu0 0
        %1246 = vmatpush1.bf16.msra.mxu0 0
        %1247 = vmatprep.subr.bf16.mxu0 0
        %1248 = vmatpush1.bf16.msra.mxu0 0
        %1249 = vmatprep.subr.bf16.mxu0 0
        %1250 = vmatpush1.bf16.msra.mxu0 0
        %1251 = vmatprep.subr.bf16.mxu0 0
        %1252 = vmatpush1.bf16.msra.mxu0 0
        %1253 = vmatprep.mubr.bf16.mxu0 0
        %1254 = vmatmul.mubr.bf16.gmra.mrb[0].mxu0 %v875
        %v1255 = vpop.f32.mrb[0].mxu0
        %v1256 = vadd.f32 %v1096, %v1255
        %v1257 = vpop.f32.mrb[0].mxu0
        %v1258 = vpop.f32.mrb[0].mxu0
        %v1259 = vpop.f32.mrb[0].mxu0
        %1260 = vdwg.mxu0
        %v1265 = vunpack.c.l.b16 %v813
        %v1266 = vunpack.c.l.b16 %v814
        %v1267 = vunpack.c.l.b16 %v815
        %v1268 = vunpack.c.l.b16 %v816
        %v1269 = vpack.c.b16 %v1266, %v1265
        %v1270 = vpack.c.b16 %v1268, %v1267
        %1273 = vmatprep.subr.bf16.mxu0 0
        %1274 = vmatpush1.bf16.msra.mxu0 %v1269
        %1275 = vmatprep.subr.bf16.mxu0 0
        %1276 = vmatpush1.bf16.msra.mxu0 %v1270
        %1277 = vmatprep.subr.bf16.mxu0 0
        %1278 = vmatpush1.bf16.msra.mxu0 0
        %1279 = vmatprep.subr.bf16.mxu0 0
        %1280 = vmatpush1.bf16.msra.mxu0 0
        %1281 = vmatprep.subr.bf16.mxu0 0
        %1282 = vmatpush1.bf16.msra.mxu0 0
        %1283 = vmatprep.subr.bf16.mxu0 0
        %1284 = vmatpush1.bf16.msra.mxu0 0
        %1285 = vmatprep.subr.bf16.mxu0 0
        %1286 = vmatpush1.bf16.msra.mxu0 0
        %1287 = vmatprep.subr.bf16.mxu0 0
        %1288 = vmatpush1.bf16.msra.mxu0 0
        %1289 = vmatprep.subr.bf16.mxu0 0
        %1290 = vmatpush1.bf16.msra.mxu0 0
        %1291 = vmatprep.subr.bf16.mxu0 0
        %1292 = vmatpush1.bf16.msra.mxu0 0
        %1293 = vmatprep.subr.bf16.mxu0 0
        %1294 = vmatpush1.bf16.msra.mxu0 0
        %1295 = vmatprep.subr.bf16.mxu0 0
        %1296 = vmatpush1.bf16.msra.mxu0 0
        %1297 = vmatprep.subr.bf16.mxu0 0
        %1298 = vmatpush1.bf16.msra.mxu0 0
        %1299 = vmatprep.subr.bf16.mxu0 0
        %1300 = vmatpush1.bf16.msra.mxu0 0
        %1301 = vmatprep.subr.bf16.mxu0 0
        %1302 = vmatpush1.bf16.msra.mxu0 0
        %1303 = vmatprep.subr.bf16.mxu0 0
        %1304 = vmatpush1.bf16.msra.mxu0 0
        %1305 = vmatprep.mubr.bf16.mxu0 0
        %1306 = vmatmul.mubr.bf16.gmra.mrb[0].mxu0 %v875
        %v1307 = vpop.f32.mrb[0].mxu0
        %v1308 = vadd.f32 %v1100, %v1307
        %v1309 = vpop.f32.mrb[0].mxu0
        %v1310 = vpop.f32.mrb[0].mxu0
        %v1311 = vpop.f32.mrb[0].mxu0
        %1312 = vdwg.mxu0
        %v1313 = vld [vmem:[#allocation13] sm:$0x1]
        %v1314 = vld [vmem:[#allocation13 + $0x1] sm:$0x1]
        %v1315 = vld [vmem:[#allocation13 + $0x2] sm:$0x1]
        %v1316 = vld [vmem:[#allocation13 + $0x3] sm:$0x1]
        %v1321 = vlaneseq
        %v1322 = vshrl.u32 %v1321, 7
        %v1323 = vsub.s32 0, %v1322
        %v1324 = vrot.slane %v1313, %v1323
        %v1325 = vlaneseq
        %v1326 = vshrl.u32 %v1325, 7
        %v1327 = vsub.s32 0, %v1326
        %v1328 = vrot.slane %v1314, %v1327
        %v1329 = vlaneseq
        %v1330 = vshrl.u32 %v1329, 7
        %v1331 = vsub.s32 0, %v1330
        %v1332 = vrot.slane %v1315, %v1331
        %v1333 = vlaneseq
        %v1334 = vshrl.u32 %v1333, 7
        %v1335 = vsub.s32 0, %v1334
        %v1336 = vrot.slane %v1316, %v1335
        %v1345 = vunpack.c.l.b16 %v817
        %v1346 = vunpack.c.l.b16 %v818
        %v1347 = vunpack.c.l.b16 %v819
        %v1348 = vunpack.c.l.b16 %v820
        %v1349 = vpack.c.b16 %v1346, %v1345
        %v1350 = vpack.c.b16 %v1348, %v1347
        %1353 = vmatprep.subr.bf16.mxu0 0
        %1354 = vmatpush1.bf16.msra.mxu0 %v1349
        %1355 = vmatprep.subr.bf16.mxu0 0
        %1356 = vmatpush1.bf16.msra.mxu0 %v1350
        %1357 = vmatprep.subr.bf16.mxu0 0
        %1358 = vmatpush1.bf16.msra.mxu0 0
        %1359 = vmatprep.subr.bf16.mxu0 0
        %1360 = vmatpush1.bf16.msra.mxu0 0
        %1361 = vmatprep.subr.bf16.mxu0 0
        %1362 = vmatpush1.bf16.msra.mxu0 0
        %1363 = vmatprep.subr.bf16.mxu0 0
        %1364 = vmatpush1.bf16.msra.mxu0 0
        %1365 = vmatprep.subr.bf16.mxu0 0
        %1366 = vmatpush1.bf16.msra.mxu0 0
        %1367 = vmatprep.subr.bf16.mxu0 0
        %1368 = vmatpush1.bf16.msra.mxu0 0
        %1369 = vmatprep.subr.bf16.mxu0 0
        %1370 = vmatpush1.bf16.msra.mxu0 0
        %1371 = vmatprep.subr.bf16.mxu0 0
        %1372 = vmatpush1.bf16.msra.mxu0 0
        %1373 = vmatprep.subr.bf16.mxu0 0
        %1374 = vmatpush1.bf16.msra.mxu0 0
        %1375 = vmatprep.subr.bf16.mxu0 0
        %1376 = vmatpush1.bf16.msra.mxu0 0
        %1377 = vmatprep.subr.bf16.mxu0 0
        %1378 = vmatpush1.bf16.msra.mxu0 0
        %1379 = vmatprep.subr.bf16.mxu0 0
        %1380 = vmatpush1.bf16.msra.mxu0 0
        %1381 = vmatprep.subr.bf16.mxu0 0
        %1382 = vmatpush1.bf16.msra.mxu0 0
        %1383 = vmatprep.subr.bf16.mxu0 0
        %1384 = vmatpush1.bf16.msra.mxu0 0
        %1385 = vmatprep.mubr.bf16.mxu0 0
        %1386 = vmatmul.mubr.bf16.gmra.mrb[0].mxu0 %v875
        %v1387 = vpop.f32.mrb[0].mxu0
        %v1388 = vadd.f32 %v1324, %v1387
        %v1389 = vpop.f32.mrb[0].mxu0
        %v1390 = vpop.f32.mrb[0].mxu0
        %v1391 = vpop.f32.mrb[0].mxu0
        %1392 = vdwg.mxu0
        %v1397 = vunpack.c.l.b16 %v821
        %v1398 = vunpack.c.l.b16 %v822
        %v1399 = vunpack.c.l.b16 %v823
        %v1400 = vunpack.c.l.b16 %v824
        %v1401 = vpack.c.b16 %v1398, %v1397
        %v1402 = vpack.c.b16 %v1400, %v1399
        %1405 = vmatprep.subr.bf16.mxu0 0
        %1406 = vmatpush1.bf16.msra.mxu0 %v1401
        %1407 = vmatprep.subr.bf16.mxu0 0
        %1408 = vmatpush1.bf16.msra.mxu0 %v1402
        %1409 = vmatprep.subr.bf16.mxu0 0
        %1410 = vmatpush1.bf16.msra.mxu0 0
        %1411 = vmatprep.subr.bf16.mxu0 0
        %1412 = vmatpush1.bf16.msra.mxu0 0
        %1413 = vmatprep.subr.bf16.mxu0 0
        %1414 = vmatpush1.bf16.msra.mxu0 0
        %1415 = vmatprep.subr.bf16.mxu0 0
        %1416 = vmatpush1.bf16.msra.mxu0 0
        %1417 = vmatprep.subr.bf16.mxu0 0
        %1418 = vmatpush1.bf16.msra.mxu0 0
        %1419 = vmatprep.subr.bf16.mxu0 0
        %1420 = vmatpush1.bf16.msra.mxu0 0
        %1421 = vmatprep.subr.bf16.mxu0 0
        %1422 = vmatpush1.bf16.msra.mxu0 0
        %1423 = vmatprep.subr.bf16.mxu0 0
        %1424 = vmatpush1.bf16.msra.mxu0 0
        %1425 = vmatprep.subr.bf16.mxu0 0
        %1426 = vmatpush1.bf16.msra.mxu0 0
        %1427 = vmatprep.subr.bf16.mxu0 0
        %1428 = vmatpush1.bf16.msra.mxu0 0
        %1429 = vmatprep.subr.bf16.mxu0 0
        %1430 = vmatpush1.bf16.msra.mxu0 0
        %1431 = vmatprep.subr.bf16.mxu0 0
        %1432 = vmatpush1.bf16.msra.mxu0 0
        %1433 = vmatprep.subr.bf16.mxu0 0
        %1434 = vmatpush1.bf16.msra.mxu0 0
        %1435 = vmatprep.subr.bf16.mxu0 0
        %1436 = vmatpush1.bf16.msra.mxu0 0
        %1437 = vmatprep.mubr.bf16.mxu0 0
        %1438 = vmatmul.mubr.bf16.gmra.mrb[0].mxu0 %v875
        %v1439 = vpop.f32.mrb[0].mxu0
        %v1440 = vadd.f32 %v1328, %v1439
        %v1441 = vpop.f32.mrb[0].mxu0
        %v1442 = vpop.f32.mrb[0].mxu0
        %v1443 = vpop.f32.mrb[0].mxu0
        %1444 = vdwg.mxu0
        %v1449 = vunpack.c.l.b16 %v825
        %v1450 = vunpack.c.l.b16 %v826
        %v1451 = vunpack.c.l.b16 %v827
        %v1452 = vunpack.c.l.b16 %v828
        %v1453 = vpack.c.b16 %v1450, %v1449
        %v1454 = vpack.c.b16 %v1452, %v1451
        %1457 = vmatprep.subr.bf16.mxu0 0
        %1458 = vmatpush1.bf16.msra.mxu0 %v1453
        %1459 = vmatprep.subr.bf16.mxu0 0
        %1460 = vmatpush1.bf16.msra.mxu0 %v1454
        %1461 = vmatprep.subr.bf16.mxu0 0
        %1462 = vmatpush1.bf16.msra.mxu0 0
        %1463 = vmatprep.subr.bf16.mxu0 0
        %1464 = vmatpush1.bf16.msra.mxu0 0
        %1465 = vmatprep.subr.bf16.mxu0 0
        %1466 = vmatpush1.bf16.msra.mxu0 0
        %1467 = vmatprep.subr.bf16.mxu0 0
        %1468 = vmatpush1.bf16.msra.mxu0 0
        %1469 = vmatprep.subr.bf16.mxu0 0
        %1470 = vmatpush1.bf16.msra.mxu0 0
        %1471 = vmatprep.subr.bf16.mxu0 0
        %1472 = vmatpush1.bf16.msra.mxu0 0
        %1473 = vmatprep.subr.bf16.mxu0 0
        %1474 = vmatpush1.bf16.msra.mxu0 0
        %1475 = vmatprep.subr.bf16.mxu0 0
        %1476 = vmatpush1.bf16.msra.mxu0 0
        %1477 = vmatprep.subr.bf16.mxu0 0
        %1478 = vmatpush1.bf16.msra.mxu0 0
        %1479 = vmatprep.subr.bf16.mxu0 0
        %1480 = vmatpush1.bf16.msra.mxu0 0
        %1481 = vmatprep.subr.bf16.mxu0 0
        %1482 = vmatpush1.bf16.msra.mxu0 0
        %1483 = vmatprep.subr.bf16.mxu0 0
        %1484 = vmatpush1.bf16.msra.mxu0 0
        %1485 = vmatprep.subr.bf16.mxu0 0
        %1486 = vmatpush1.bf16.msra.mxu0 0
        %1487 = vmatprep.subr.bf16.mxu0 0
        %1488 = vmatpush1.bf16.msra.mxu0 0
        %1489 = vmatprep.mubr.bf16.mxu0 0
        %1490 = vmatmul.mubr.bf16.gmra.mrb[0].mxu0 %v875
        %v1491 = vpop.f32.mrb[0].mxu0
        %v1492 = vadd.f32 %v1332, %v1491
        %v1493 = vpop.f32.mrb[0].mxu0
        %v1494 = vpop.f32.mrb[0].mxu0
        %v1495 = vpop.f32.mrb[0].mxu0
        %1496 = vdwg.mxu0
        %v1501 = vunpack.c.l.b16 %v829
        %v1502 = vunpack.c.l.b16 %v830
        %v1503 = vunpack.c.l.b16 %v831
        %v1504 = vunpack.c.l.b16 %v832
        %v1505 = vpack.c.b16 %v1502, %v1501
        %v1506 = vpack.c.b16 %v1504, %v1503
        %1509 = vmatprep.subr.bf16.mxu0 0
        %1510 = vmatpush1.bf16.msra.mxu0 %v1505
        %1511 = vmatprep.subr.bf16.mxu0 0
        %1512 = vmatpush1.bf16.msra.mxu0 %v1506
        %1513 = vmatprep.subr.bf16.mxu0 0
        %1514 = vmatpush1.bf16.msra.mxu0 0
        %1515 = vmatprep.subr.bf16.mxu0 0
        %1516 = vmatpush1.bf16.msra.mxu0 0
        %1517 = vmatprep.subr.bf16.mxu0 0
        %1518 = vmatpush1.bf16.msra.mxu0 0
        %1519 = vmatprep.subr.bf16.mxu0 0
        %1520 = vmatpush1.bf16.msra.mxu0 0
        %1521 = vmatprep.subr.bf16.mxu0 0
        %1522 = vmatpush1.bf16.msra.mxu0 0
        %1523 = vmatprep.subr.bf16.mxu0 0
        %1524 = vmatpush1.bf16.msra.mxu0 0
        %1525 = vmatprep.subr.bf16.mxu0 0
        %1526 = vmatpush1.bf16.msra.mxu0 0
        %1527 = vmatprep.subr.bf16.mxu0 0
        %1528 = vmatpush1.bf16.msra.mxu0 0
        %1529 = vmatprep.subr.bf16.mxu0 0
        %1530 = vmatpush1.bf16.msra.mxu0 0
        %1531 = vmatprep.subr.bf16.mxu0 0
        %1532 = vmatpush1.bf16.msra.mxu0 0
        %1533 = vmatprep.subr.bf16.mxu0 0
        %1534 = vmatpush1.bf16.msra.mxu0 0
        %1535 = vmatprep.subr.bf16.mxu0 0
        %1536 = vmatpush1.bf16.msra.mxu0 0
        %1537 = vmatprep.subr.bf16.mxu0 0
        %1538 = vmatpush1.bf16.msra.mxu0 0
        %1539 = vmatprep.subr.bf16.mxu0 0
        %1540 = vmatpush1.bf16.msra.mxu0 0
        %1541 = vmatprep.mubr.bf16.mxu0 0
        %1542 = vmatmul.mubr.bf16.gmra.mrb[0].mxu0 %v875
        %v1543 = vpop.f32.mrb[0].mxu0
        %v1544 = vadd.f32 %v1336, %v1543
        %v1545 = vpop.f32.mrb[0].mxu0
        %v1546 = vpop.f32.mrb[0].mxu0
        %v1547 = vpop.f32.mrb[0].mxu0
        %1548 = vdwg.mxu0
        %v1549 = vpack.c.bf16 %v1073, %v1073
        %v1550 = vpack.c.bf16 %v1074, %v1074
        %v1551 = vpack.c.bf16 %v1075, %v1075
        %v1552 = vpack.c.bf16 %v1076, %v1076
        %v1553 = vpack.c.bf16 %v1152, %v1152
        %v1554 = vpack.c.bf16 %v1204, %v1204
        %v1555 = vpack.c.bf16 %v1256, %v1256
        %v1556 = vpack.c.bf16 %v1308, %v1308
        %vm1557 = vcmask 64512
        %v1559 = vsel %vm1557, %v1549, 0
        %v1562 = vsel %vm1557, %v1553, 0
        %1564 = vmatprep.subr.bf16.mxu0 0
        %1565 = vmatpush1.bf16.xpose.msra.mxu0 %v1562
        %1566 = vmatprep.subr.bf16.mxu0 0
        %1567 = vmatpush1.bf16.xpose.msra.mxu0 0
        %1568 = vmatprep.subr.bf16.mxu0 0
        %1569 = vmatpush1.bf16.xpose.msra.mxu0 0
        %1570 = vmatprep.subr.bf16.mxu0 0
        %1571 = vmatpush1.bf16.xpose.msra.mxu0 0
        %1572 = vmatprep.subr.bf16.mxu0 0
        %1573 = vmatpush1.bf16.xpose.msra.mxu0 0
        %1574 = vmatprep.subr.bf16.mxu0 0
        %1575 = vmatpush1.bf16.xpose.msra.mxu0 0
        %1576 = vmatprep.subr.bf16.mxu0 0
        %1577 = vmatpush1.bf16.xpose.msra.mxu0 0
        %1578 = vmatprep.subr.bf16.mxu0 0
        %1579 = vmatpush1.bf16.xpose.msra.mxu0 0
        %1580 = vmatprep.subr.bf16.mxu0 0
        %1581 = vmatpush1.bf16.xpose.msra.mxu0 0
        %1582 = vmatprep.subr.bf16.mxu0 0
        %1583 = vmatpush1.bf16.xpose.msra.mxu0 0
        %1584 = vmatprep.subr.bf16.mxu0 0
        %1585 = vmatpush1.bf16.xpose.msra.mxu0 0
        %1586 = vmatprep.subr.bf16.mxu0 0
        %1587 = vmatpush1.bf16.xpose.msra.mxu0 0
        %1588 = vmatprep.subr.bf16.mxu0 0
        %1589 = vmatpush1.bf16.xpose.msra.mxu0 0
        %1590 = vmatprep.subr.bf16.mxu0 0
        %1591 = vmatpush1.bf16.xpose.msra.mxu0 0
        %1592 = vmatprep.subr.bf16.mxu0 0
        %1593 = vmatpush1.bf16.xpose.msra.mxu0 0
        %1594 = vmatprep.subr.bf16.mxu0 0
        %1595 = vmatpush1.bf16.xpose.msra.mxu0 0
        %1596 = vmatprep.mubr.bf16.mxu0 0
        %1597 = vmatmul.mubr.bf16.gmra.mrb[0].mxu0 %v1559
        %v1598 = vpop.f32.mrb[0].mxu0
        %v1599 = vadd.f32 0.0, %v1598
        %v1600 = vpop.f32.mrb[0].mxu0
        %v1601 = vpop.f32.mrb[0].mxu0
        %v1602 = vpop.f32.mrb[0].mxu0
        %1603 = vdwg.mxu0
        %v1605 = vsel %vm1557, %v1550, 0
        %v1608 = vsel %vm1557, %v1554, 0
        %1610 = vmatprep.subr.bf16.mxu0 0
        %1611 = vmatpush1.bf16.xpose.msra.mxu0 %v1608
        %1612 = vmatprep.subr.bf16.mxu0 0
        %1613 = vmatpush1.bf16.xpose.msra.mxu0 0
        %1614 = vmatprep.subr.bf16.mxu0 0
        %1615 = vmatpush1.bf16.xpose.msra.mxu0 0
        %1616 = vmatprep.subr.bf16.mxu0 0
        %1617 = vmatpush1.bf16.xpose.msra.mxu0 0
        %1618 = vmatprep.subr.bf16.mxu0 0
        %1619 = vmatpush1.bf16.xpose.msra.mxu0 0
        %1620 = vmatprep.subr.bf16.mxu0 0
        %1621 = vmatpush1.bf16.xpose.msra.mxu0 0
        %1622 = vmatprep.subr.bf16.mxu0 0
        %1623 = vmatpush1.bf16.xpose.msra.mxu0 0
        %1624 = vmatprep.subr.bf16.mxu0 0
        %1625 = vmatpush1.bf16.xpose.msra.mxu0 0
        %1626 = vmatprep.subr.bf16.mxu0 0
        %1627 = vmatpush1.bf16.xpose.msra.mxu0 0
        %1628 = vmatprep.subr.bf16.mxu0 0
        %1629 = vmatpush1.bf16.xpose.msra.mxu0 0
        %1630 = vmatprep.subr.bf16.mxu0 0
        %1631 = vmatpush1.bf16.xpose.msra.mxu0 0
        %1632 = vmatprep.subr.bf16.mxu0 0
        %1633 = vmatpush1.bf16.xpose.msra.mxu0 0
        %1634 = vmatprep.subr.bf16.mxu0 0
        %1635 = vmatpush1.bf16.xpose.msra.mxu0 0
        %1636 = vmatprep.subr.bf16.mxu0 0
        %1637 = vmatpush1.bf16.xpose.msra.mxu0 0
        %1638 = vmatprep.subr.bf16.mxu0 0
        %1639 = vmatpush1.bf16.xpose.msra.mxu0 0
        %1640 = vmatprep.subr.bf16.mxu0 0
        %1641 = vmatpush1.bf16.xpose.msra.mxu0 0
        %1642 = vmatprep.mubr.bf16.mxu0 0
        %1643 = vmatmul.mubr.bf16.gmra.mrb[0].mxu0 %v1605
        %v1644 = vpop.f32.mrb[0].mxu0
        %v1645 = vadd.f32 0.0, %v1644
        %v1646 = vpop.f32.mrb[0].mxu0
        %v1647 = vpop.f32.mrb[0].mxu0
        %v1648 = vpop.f32.mrb[0].mxu0
        %1649 = vdwg.mxu0
        %v1651 = vsel %vm1557, %v1551, 0
        %v1654 = vsel %vm1557, %v1555, 0
        %1656 = vmatprep.subr.bf16.mxu0 0
        %1657 = vmatpush1.bf16.xpose.msra.mxu0 %v1654
        %1658 = vmatprep.subr.bf16.mxu0 0
        %1659 = vmatpush1.bf16.xpose.msra.mxu0 0
        %1660 = vmatprep.subr.bf16.mxu0 0
        %1661 = vmatpush1.bf16.xpose.msra.mxu0 0
        %1662 = vmatprep.subr.bf16.mxu0 0
        %1663 = vmatpush1.bf16.xpose.msra.mxu0 0
        %1664 = vmatprep.subr.bf16.mxu0 0
        %1665 = vmatpush1.bf16.xpose.msra.mxu0 0
        %1666 = vmatprep.subr.bf16.mxu0 0
        %1667 = vmatpush1.bf16.xpose.msra.mxu0 0
        %1668 = vmatprep.subr.bf16.mxu0 0
        %1669 = vmatpush1.bf16.xpose.msra.mxu0 0
        %1670 = vmatprep.subr.bf16.mxu0 0
        %1671 = vmatpush1.bf16.xpose.msra.mxu0 0
        %1672 = vmatprep.subr.bf16.mxu0 0
        %1673 = vmatpush1.bf16.xpose.msra.mxu0 0
        %1674 = vmatprep.subr.bf16.mxu0 0
        %1675 = vmatpush1.bf16.xpose.msra.mxu0 0
        %1676 = vmatprep.subr.bf16.mxu0 0
        %1677 = vmatpush1.bf16.xpose.msra.mxu0 0
        %1678 = vmatprep.subr.bf16.mxu0 0
        %1679 = vmatpush1.bf16.xpose.msra.mxu0 0
        %1680 = vmatprep.subr.bf16.mxu0 0
        %1681 = vmatpush1.bf16.xpose.msra.mxu0 0
        %1682 = vmatprep.subr.bf16.mxu0 0
        %1683 = vmatpush1.bf16.xpose.msra.mxu0 0
        %1684 = vmatprep.subr.bf16.mxu0 0
        %1685 = vmatpush1.bf16.xpose.msra.mxu0 0
        %1686 = vmatprep.subr.bf16.mxu0 0
        %1687 = vmatpush1.bf16.xpose.msra.mxu0 0
        %1688 = vmatprep.mubr.bf16.mxu0 0
        %1689 = vmatmul.mubr.bf16.gmra.mrb[0].mxu0 %v1651
        %v1690 = vpop.f32.mrb[0].mxu0
        %v1691 = vadd.f32 0.0, %v1690
        %v1692 = vpop.f32.mrb[0].mxu0
        %v1693 = vpop.f32.mrb[0].mxu0
        %v1694 = vpop.f32.mrb[0].mxu0
        %1695 = vdwg.mxu0
        %v1697 = vsel %vm1557, %v1552, 0
        %v1700 = vsel %vm1557, %v1556, 0
        %1702 = vmatprep.subr.bf16.mxu0 0
        %1703 = vmatpush1.bf16.xpose.msra.mxu0 %v1700
        %1704 = vmatprep.subr.bf16.mxu0 0
        %1705 = vmatpush1.bf16.xpose.msra.mxu0 0
        %1706 = vmatprep.subr.bf16.mxu0 0
        %1707 = vmatpush1.bf16.xpose.msra.mxu0 0
        %1708 = vmatprep.subr.bf16.mxu0 0
        %1709 = vmatpush1.bf16.xpose.msra.mxu0 0
        %1710 = vmatprep.subr.bf16.mxu0 0
        %1711 = vmatpush1.bf16.xpose.msra.mxu0 0
        %1712 = vmatprep.subr.bf16.mxu0 0
        %1713 = vmatpush1.bf16.xpose.msra.mxu0 0
        %1714 = vmatprep.subr.bf16.mxu0 0
        %1715 = vmatpush1.bf16.xpose.msra.mxu0 0
        %1716 = vmatprep.subr.bf16.mxu0 0
        %1717 = vmatpush1.bf16.xpose.msra.mxu0 0
        %1718 = vmatprep.subr.bf16.mxu0 0
        %1719 = vmatpush1.bf16.xpose.msra.mxu0 0
        %1720 = vmatprep.subr.bf16.mxu0 0
        %1721 = vmatpush1.bf16.xpose.msra.mxu0 0
        %1722 = vmatprep.subr.bf16.mxu0 0
        %1723 = vmatpush1.bf16.xpose.msra.mxu0 0
        %1724 = vmatprep.subr.bf16.mxu0 0
        %1725 = vmatpush1.bf16.xpose.msra.mxu0 0
        %1726 = vmatprep.subr.bf16.mxu0 0
        %1727 = vmatpush1.bf16.xpose.msra.mxu0 0
        %1728 = vmatprep.subr.bf16.mxu0 0
        %1729 = vmatpush1.bf16.xpose.msra.mxu0 0
        %1730 = vmatprep.subr.bf16.mxu0 0
        %1731 = vmatpush1.bf16.xpose.msra.mxu0 0
        %1732 = vmatprep.subr.bf16.mxu0 0
        %1733 = vmatpush1.bf16.xpose.msra.mxu0 0
        %1734 = vmatprep.mubr.bf16.mxu0 0
        %1735 = vmatmul.mubr.bf16.gmra.mrb[0].mxu0 %v1697
        %v1736 = vpop.f32.mrb[0].mxu0
        %v1737 = vadd.f32 0.0, %v1736
        %v1738 = vpop.f32.mrb[0].mxu0
        %v1739 = vpop.f32.mrb[0].mxu0
        %v1740 = vpop.f32.mrb[0].mxu0
        %1741 = vdwg.mxu0
        %v1742 = vsel %vm1557, %v1599, -inf
        %1743 = vmax.xlane.f32.xlu0 %v1742
        %v1744 = vpop.xlane.xlu0 %1743
        %v1745 = vsel %vm1557, %v1645, -inf
        %1746 = vmax.xlane.f32.xlu0 %v1745
        %v1747 = vpop.xlane.xlu0 %1746
        %v1748 = vsel %vm1557, %v1691, -inf
        %1749 = vmax.xlane.f32.xlu0 %v1748
        %v1750 = vpop.xlane.xlu0 %1749
        %v1751 = vsel %vm1557, %v1737, -inf
        %1752 = vmax.xlane.f32.xlu0 %v1751
        %v1753 = vpop.xlane.xlu0 %1752
        %v1754 = vsub.f32 %v1599, %v1744
        %v1755 = vsub.f32 %v1645, %v1747
        %v1756 = vsub.f32 %v1691, %v1750
        %v1757 = vsub.f32 %v1737, %v1753
        %v1758 = vmul.f32 %v1754, 1.442695
        %v1759 = vpow.pop %v1758
        %v1760 = vmul.f32 %v1755, 1.442695
        %v1761 = vpow.pop %v1760
        %v1762 = vmul.f32 %v1756, 1.442695
        %v1763 = vpow.pop %v1762
        %v1764 = vmul.f32 %v1757, 1.442695
        %v1765 = vpow.pop %v1764
        %v1766 = vsel %vm1557, %v1759, 0.0
        %1767 = vadd.xlane.f32.xlu0 %v1766
        %v1768 = vpop.xlane.xlu0 %1767
        %v1769 = vsel %vm1557, %v1761, 0.0
        %1770 = vadd.xlane.f32.xlu0 %v1769
        %v1771 = vpop.xlane.xlu0 %1770
        %v1772 = vsel %vm1557, %v1763, 0.0
        %1773 = vadd.xlane.f32.xlu0 %v1772
        %v1774 = vpop.xlane.xlu0 %1773
        %v1775 = vsel %vm1557, %v1765, 0.0
        %1776 = vadd.xlane.f32.xlu0 %v1775
        %v1777 = vpop.xlane.xlu0 %1776
        %v1778 = vrcp.pop %v1768
        %v1779 = vrcp.pop %v1771
        %v1780 = vrcp.pop %v1774
        %v1781 = vrcp.pop %v1777
        %v1782 = vmul.f32 %v1759, %v1778
        %v1783 = vmul.f32 %v1761, %v1779
        %v1784 = vmul.f32 %v1763, %v1780
        %v1785 = vmul.f32 %v1765, %v1781
        %v1786 = vpack.c.bf16 %v1782, %v1782
        %v1787 = vpack.c.bf16 %v1783, %v1783
        %v1788 = vpack.c.bf16 %v1784, %v1784
        %v1789 = vpack.c.bf16 %v1785, %v1785
        %v1790 = vpack.c.bf16 %v1388, %v1388
        %v1791 = vpack.c.bf16 %v1440, %v1440
        %v1792 = vpack.c.bf16 %v1492, %v1492
        %v1793 = vpack.c.bf16 %v1544, %v1544
        %v1795 = vsel %vm1557, %v1786, 0
        %vm1797 = vcmask 1043456
        %v1799 = vsel %vm1797, %v1790, 0
        %1801 = vmatprep.subr.bf16.mxu0 0
        %1802 = vmatpush1.bf16.msra.mxu0 %v1799
        %1803 = vmatprep.subr.bf16.mxu0 0
        %1804 = vmatpush1.bf16.msra.mxu0 0
        %1805 = vmatprep.subr.bf16.mxu0 0
        %1806 = vmatpush1.bf16.msra.mxu0 0
        %1807 = vmatprep.subr.bf16.mxu0 0
        %1808 = vmatpush1.bf16.msra.mxu0 0
        %1809 = vmatprep.subr.bf16.mxu0 0
        %1810 = vmatpush1.bf16.msra.mxu0 0
        %1811 = vmatprep.subr.bf16.mxu0 0
        %1812 = vmatpush1.bf16.msra.mxu0 0
        %1813 = vmatprep.subr.bf16.mxu0 0
        %1814 = vmatpush1.bf16.msra.mxu0 0
        %1815 = vmatprep.subr.bf16.mxu0 0
        %1816 = vmatpush1.bf16.msra.mxu0 0
        %1817 = vmatprep.subr.bf16.mxu0 0
        %1818 = vmatpush1.bf16.msra.mxu0 0
        %1819 = vmatprep.subr.bf16.mxu0 0
        %1820 = vmatpush1.bf16.msra.mxu0 0
        %1821 = vmatprep.subr.bf16.mxu0 0
        %1822 = vmatpush1.bf16.msra.mxu0 0
        %1823 = vmatprep.subr.bf16.mxu0 0
        %1824 = vmatpush1.bf16.msra.mxu0 0
        %1825 = vmatprep.subr.bf16.mxu0 0
        %1826 = vmatpush1.bf16.msra.mxu0 0
        %1827 = vmatprep.subr.bf16.mxu0 0
        %1828 = vmatpush1.bf16.msra.mxu0 0
        %1829 = vmatprep.subr.bf16.mxu0 0
        %1830 = vmatpush1.bf16.msra.mxu0 0
        %1831 = vmatprep.subr.bf16.mxu0 0
        %1832 = vmatpush1.bf16.msra.mxu0 0
        %1833 = vmatprep.mubr.bf16.mxu0 0
        %1834 = vmatmul.mubr.bf16.gmra.mrb[0].mxu0 %v1795
        %v1835 = vpop.f32.mrb[0].mxu0
        %v1836 = vadd.f32 0.0, %v1835
        %v1837 = vpop.f32.mrb[0].mxu0
        %v1838 = vpop.f32.mrb[0].mxu0
        %v1839 = vpop.f32.mrb[0].mxu0
        %1840 = vdwg.mxu0
        %v1842 = vsel %vm1557, %v1787, 0
        %v1845 = vsel %vm1797, %v1791, 0
        %1847 = vmatprep.subr.bf16.mxu0 0
        %1848 = vmatpush1.bf16.msra.mxu0 %v1845
        %1849 = vmatprep.subr.bf16.mxu0 0
        %1850 = vmatpush1.bf16.msra.mxu0 0
        %1851 = vmatprep.subr.bf16.mxu0 0
        %1852 = vmatpush1.bf16.msra.mxu0 0
        %1853 = vmatprep.subr.bf16.mxu0 0
        %1854 = vmatpush1.bf16.msra.mxu0 0
        %1855 = vmatprep.subr.bf16.mxu0 0
        %1856 = vmatpush1.bf16.msra.mxu0 0
        %1857 = vmatprep.subr.bf16.mxu0 0
        %1858 = vmatpush1.bf16.msra.mxu0 0
        %1859 = vmatprep.subr.bf16.mxu0 0
        %1860 = vmatpush1.bf16.msra.mxu0 0
        %1861 = vmatprep.subr.bf16.mxu0 0
        %1862 = vmatpush1.bf16.msra.mxu0 0
        %1863 = vmatprep.subr.bf16.mxu0 0
        %1864 = vmatpush1.bf16.msra.mxu0 0
        %1865 = vmatprep.subr.bf16.mxu0 0
        %1866 = vmatpush1.bf16.msra.mxu0 0
        %1867 = vmatprep.subr.bf16.mxu0 0
        %1868 = vmatpush1.bf16.msra.mxu0 0
        %1869 = vmatprep.subr.bf16.mxu0 0
        %1870 = vmatpush1.bf16.msra.mxu0 0
        %1871 = vmatprep.subr.bf16.mxu0 0
        %1872 = vmatpush1.bf16.msra.mxu0 0
        %1873 = vmatprep.subr.bf16.mxu0 0
        %1874 = vmatpush1.bf16.msra.mxu0 0
        %1875 = vmatprep.subr.bf16.mxu0 0
        %1876 = vmatpush1.bf16.msra.mxu0 0
        %1877 = vmatprep.subr.bf16.mxu0 0
        %1878 = vmatpush1.bf16.msra.mxu0 0
        %1879 = vmatprep.mubr.bf16.mxu0 0
        %1880 = vmatmul.mubr.bf16.gmra.mrb[0].mxu0 %v1842
        %v1881 = vpop.f32.mrb[0].mxu0
        %v1882 = vadd.f32 0.0, %v1881
        %v1883 = vpop.f32.mrb[0].mxu0
        %v1884 = vpop.f32.mrb[0].mxu0
        %v1885 = vpop.f32.mrb[0].mxu0
        %1886 = vdwg.mxu0
        %v1888 = vsel %vm1557, %v1788, 0
        %v1891 = vsel %vm1797, %v1792, 0
        %1893 = vmatprep.subr.bf16.mxu0 0
        %1894 = vmatpush1.bf16.msra.mxu0 %v1891
        %1895 = vmatprep.subr.bf16.mxu0 0
        %1896 = vmatpush1.bf16.msra.mxu0 0
        %1897 = vmatprep.subr.bf16.mxu0 0
        %1898 = vmatpush1.bf16.msra.mxu0 0
        %1899 = vmatprep.subr.bf16.mxu0 0
        %1900 = vmatpush1.bf16.msra.mxu0 0
        %1901 = vmatprep.subr.bf16.mxu0 0
        %1902 = vmatpush1.bf16.msra.mxu0 0
        %1903 = vmatprep.subr.bf16.mxu0 0
        %1904 = vmatpush1.bf16.msra.mxu0 0
        %1905 = vmatprep.subr.bf16.mxu0 0
        %1906 = vmatpush1.bf16.msra.mxu0 0
        %1907 = vmatprep.subr.bf16.mxu0 0
        %1908 = vmatpush1.bf16.msra.mxu0 0
        %1909 = vmatprep.subr.bf16.mxu0 0
        %1910 = vmatpush1.bf16.msra.mxu0 0
        %1911 = vmatprep.subr.bf16.mxu0 0
        %1912 = vmatpush1.bf16.msra.mxu0 0
        %1913 = vmatprep.subr.bf16.mxu0 0
        %1914 = vmatpush1.bf16.msra.mxu0 0
        %1915 = vmatprep.subr.bf16.mxu0 0
        %1916 = vmatpush1.bf16.msra.mxu0 0
        %1917 = vmatprep.subr.bf16.mxu0 0
        %1918 = vmatpush1.bf16.msra.mxu0 0
        %1919 = vmatprep.subr.bf16.mxu0 0
        %1920 = vmatpush1.bf16.msra.mxu0 0
        %1921 = vmatprep.subr.bf16.mxu0 0
        %1922 = vmatpush1.bf16.msra.mxu0 0
        %1923 = vmatprep.subr.bf16.mxu0 0
        %1924 = vmatpush1.bf16.msra.mxu0 0
        %1925 = vmatprep.mubr.bf16.mxu0 0
        %1926 = vmatmul.mubr.bf16.gmra.mrb[0].mxu0 %v1888
        %v1927 = vpop.f32.mrb[0].mxu0
        %v1928 = vadd.f32 0.0, %v1927
        %v1929 = vpop.f32.mrb[0].mxu0
        %v1930 = vpop.f32.mrb[0].mxu0
        %v1931 = vpop.f32.mrb[0].mxu0
        %1932 = vdwg.mxu0
        %v1934 = vsel %vm1557, %v1789, 0
        %v1937 = vsel %vm1797, %v1793, 0
        %1939 = vmatprep.subr.bf16.mxu0 0
        %1940 = vmatpush1.bf16.msra.mxu0 %v1937
        %1941 = vmatprep.subr.bf16.mxu0 0
        %1942 = vmatpush1.bf16.msra.mxu0 0
        %1943 = vmatprep.subr.bf16.mxu0 0
        %1944 = vmatpush1.bf16.msra.mxu0 0
        %1945 = vmatprep.subr.bf16.mxu0 0
        %1946 = vmatpush1.bf16.msra.mxu0 0
        %1947 = vmatprep.subr.bf16.mxu0 0
        %1948 = vmatpush1.bf16.msra.mxu0 0
        %1949 = vmatprep.subr.bf16.mxu0 0
        %1950 = vmatpush1.bf16.msra.mxu0 0
        %1951 = vmatprep.subr.bf16.mxu0 0
        %1952 = vmatpush1.bf16.msra.mxu0 0
        %1953 = vmatprep.subr.bf16.mxu0 0
        %1954 = vmatpush1.bf16.msra.mxu0 0
        %1955 = vmatprep.subr.bf16.mxu0 0
        %1956 = vmatpush1.bf16.msra.mxu0 0
        %1957 = vmatprep.subr.bf16.mxu0 0
        %1958 = vmatpush1.bf16.msra.mxu0 0
        %1959 = vmatprep.subr.bf16.mxu0 0
        %1960 = vmatpush1.bf16.msra.mxu0 0
        %1961 = vmatprep.subr.bf16.mxu0 0
        %1962 = vmatpush1.bf16.msra.mxu0 0
        %1963 = vmatprep.subr.bf16.mxu0 0
        %1964 = vmatpush1.bf16.msra.mxu0 0
        %1965 = vmatprep.subr.bf16.mxu0 0
        %1966 = vmatpush1.bf16.msra.mxu0 0
        %1967 = vmatprep.subr.bf16.mxu0 0
        %1968 = vmatpush1.bf16.msra.mxu0 0
        %1969 = vmatprep.subr.bf16.mxu0 0
        %1970 = vmatpush1.bf16.msra.mxu0 0
        %1971 = vmatprep.mubr.bf16.mxu0 0
        %1972 = vmatmul.mubr.bf16.gmra.mrb[0].mxu0 %v1934
        %v1973 = vpop.f32.mrb[0].mxu0
        %v1974 = vadd.f32 0.0, %v1973
        %v1975 = vpop.f32.mrb[0].mxu0
        %v1976 = vpop.f32.mrb[0].mxu0
        %v1977 = vpop.f32.mrb[0].mxu0
        %1978 = vdwg.mxu0
        %v1979 = vpack.c.bf16 %v1836, %v1836
        %v1980 = vpack.c.bf16 %v1882, %v1882
        %v1981 = vpack.c.bf16 %v1928, %v1928
        %v1982 = vpack.c.bf16 %v1974, %v1974
        %v1983 = vld [vmem:[#allocation14] sm:$0xf]
        %v1984 = vld [vmem:[#allocation14 + $0x4] sm:$0xf]
        %v1985 = vld [vmem:[#allocation14 + $0x8] sm:$0xf]
        %v1986 = vld [vmem:[#allocation14 + $0xc] sm:$0xf]
        %v1988 = vsel %vm1557, %v1979, 0
        %v1991 = vsel %vm1797, %v1983, 0
        %1993 = vmatprep.subr.bf16.mxu0 0
        %1994 = vmatpush1.bf16.msra.mxu0 %v1991
        %1995 = vmatprep.subr.bf16.mxu0 0
        %1996 = vmatpush1.bf16.msra.mxu0 0
        %1997 = vmatprep.subr.bf16.mxu0 0
        %1998 = vmatpush1.bf16.msra.mxu0 0
        %1999 = vmatprep.subr.bf16.mxu0 0
        %2000 = vmatpush1.bf16.msra.mxu0 0
        %2001 = vmatprep.subr.bf16.mxu0 0
        %2002 = vmatpush1.bf16.msra.mxu0 0
        %2003 = vmatprep.subr.bf16.mxu0 0
        %2004 = vmatpush1.bf16.msra.mxu0 0
        %2005 = vmatprep.subr.bf16.mxu0 0
        %2006 = vmatpush1.bf16.msra.mxu0 0
        %2007 = vmatprep.subr.bf16.mxu0 0
        %2008 = vmatpush1.bf16.msra.mxu0 0
        %2009 = vmatprep.subr.bf16.mxu0 0
        %2010 = vmatpush1.bf16.msra.mxu0 0
        %2011 = vmatprep.subr.bf16.mxu0 0
        %2012 = vmatpush1.bf16.msra.mxu0 0
        %2013 = vmatprep.subr.bf16.mxu0 0
        %2014 = vmatpush1.bf16.msra.mxu0 0
        %2015 = vmatprep.subr.bf16.mxu0 0
        %2016 = vmatpush1.bf16.msra.mxu0 0
        %2017 = vmatprep.subr.bf16.mxu0 0
        %2018 = vmatpush1.bf16.msra.mxu0 0
        %2019 = vmatprep.subr.bf16.mxu0 0
        %2020 = vmatpush1.bf16.msra.mxu0 0
        %2021 = vmatprep.subr.bf16.mxu0 0
        %2022 = vmatpush1.bf16.msra.mxu0 0
        %2023 = vmatprep.subr.bf16.mxu0 0
        %2024 = vmatpush1.bf16.msra.mxu0 0
        %2025 = vmatprep.mubr.bf16.mxu0 0
        %2026 = vmatmul.mubr.bf16.gmra.mrb[0].mxu0 %v1988
        %v2027 = vpop.f32.mrb[0].mxu0
        %v2028 = vadd.f32 0.0, %v2027
        %v2029 = vpop.f32.mrb[0].mxu0
        %v2030 = vpop.f32.mrb[0].mxu0
        %v2031 = vpop.f32.mrb[0].mxu0
        %2032 = vdwg.mxu0
        %v2034 = vsel %vm1557, %v1980, 0
        %v2037 = vsel %vm1797, %v1984, 0
        %2039 = vmatprep.subr.bf16.mxu0 0
        %2040 = vmatpush1.bf16.msra.mxu0 %v2037
        %2041 = vmatprep.subr.bf16.mxu0 0
        %2042 = vmatpush1.bf16.msra.mxu0 0
        %2043 = vmatprep.subr.bf16.mxu0 0
        %2044 = vmatpush1.bf16.msra.mxu0 0
        %2045 = vmatprep.subr.bf16.mxu0 0
        %2046 = vmatpush1.bf16.msra.mxu0 0
        %2047 = vmatprep.subr.bf16.mxu0 0
        %2048 = vmatpush1.bf16.msra.mxu0 0
        %2049 = vmatprep.subr.bf16.mxu0 0
        %2050 = vmatpush1.bf16.msra.mxu0 0
        %2051 = vmatprep.subr.bf16.mxu0 0
        %2052 = vmatpush1.bf16.msra.mxu0 0
        %2053 = vmatprep.subr.bf16.mxu0 0
        %2054 = vmatpush1.bf16.msra.mxu0 0
        %2055 = vmatprep.subr.bf16.mxu0 0
        %2056 = vmatpush1.bf16.msra.mxu0 0
        %2057 = vmatprep.subr.bf16.mxu0 0
        %2058 = vmatpush1.bf16.msra.mxu0 0
        %2059 = vmatprep.subr.bf16.mxu0 0
        %2060 = vmatpush1.bf16.msra.mxu0 0
        %2061 = vmatprep.subr.bf16.mxu0 0
        %2062 = vmatpush1.bf16.msra.mxu0 0
        %2063 = vmatprep.subr.bf16.mxu0 0
        %2064 = vmatpush1.bf16.msra.mxu0 0
        %2065 = vmatprep.subr.bf16.mxu0 0
        %2066 = vmatpush1.bf16.msra.mxu0 0
        %2067 = vmatprep.subr.bf16.mxu0 0
        %2068 = vmatpush1.bf16.msra.mxu0 0
        %2069 = vmatprep.subr.bf16.mxu0 0
        %2070 = vmatpush1.bf16.msra.mxu0 0
        %2071 = vmatprep.mubr.bf16.mxu0 0
        %2072 = vmatmul.mubr.bf16.gmra.mrb[0].mxu0 %v2034
        %v2073 = vpop.f32.mrb[0].mxu0
        %v2074 = vadd.f32 0.0, %v2073
        %v2075 = vpop.f32.mrb[0].mxu0
        %v2076 = vpop.f32.mrb[0].mxu0
        %v2077 = vpop.f32.mrb[0].mxu0
        %2078 = vdwg.mxu0
        %v2080 = vsel %vm1557, %v1981, 0
        %v2083 = vsel %vm1797, %v1985, 0
        %2085 = vmatprep.subr.bf16.mxu0 0
        %2086 = vmatpush1.bf16.msra.mxu0 %v2083
        %2087 = vmatprep.subr.bf16.mxu0 0
        %2088 = vmatpush1.bf16.msra.mxu0 0
        %2089 = vmatprep.subr.bf16.mxu0 0
        %2090 = vmatpush1.bf16.msra.mxu0 0
        %2091 = vmatprep.subr.bf16.mxu0 0
        %2092 = vmatpush1.bf16.msra.mxu0 0
        %2093 = vmatprep.subr.bf16.mxu0 0
        %2094 = vmatpush1.bf16.msra.mxu0 0
        %2095 = vmatprep.subr.bf16.mxu0 0
        %2096 = vmatpush1.bf16.msra.mxu0 0
        %2097 = vmatprep.subr.bf16.mxu0 0
        %2098 = vmatpush1.bf16.msra.mxu0 0
        %2099 = vmatprep.subr.bf16.mxu0 0
        %2100 = vmatpush1.bf16.msra.mxu0 0
        %2101 = vmatprep.subr.bf16.mxu0 0
        %2102 = vmatpush1.bf16.msra.mxu0 0
        %2103 = vmatprep.subr.bf16.mxu0 0
        %2104 = vmatpush1.bf16.msra.mxu0 0
        %2105 = vmatprep.subr.bf16.mxu0 0
        %2106 = vmatpush1.bf16.msra.mxu0 0
        %2107 = vmatprep.subr.bf16.mxu0 0
        %2108 = vmatpush1.bf16.msra.mxu0 0
        %2109 = vmatprep.subr.bf16.mxu0 0
        %2110 = vmatpush1.bf16.msra.mxu0 0
        %2111 = vmatprep.subr.bf16.mxu0 0
        %2112 = vmatpush1.bf16.msra.mxu0 0
        %2113 = vmatprep.subr.bf16.mxu0 0
        %2114 = vmatpush1.bf16.msra.mxu0 0
        %2115 = vmatprep.subr.bf16.mxu0 0
        %2116 = vmatpush1.bf16.msra.mxu0 0
        %2117 = vmatprep.mubr.bf16.mxu0 0
        %2118 = vmatmul.mubr.bf16.gmra.mrb[0].mxu0 %v2080
        %v2119 = vpop.f32.mrb[0].mxu0
        %v2120 = vadd.f32 0.0, %v2119
        %v2121 = vpop.f32.mrb[0].mxu0
        %v2122 = vpop.f32.mrb[0].mxu0
        %v2123 = vpop.f32.mrb[0].mxu0
        %2124 = vdwg.mxu0
        %v2126 = vsel %vm1557, %v1982, 0
        %v2129 = vsel %vm1797, %v1986, 0
        %2131 = vmatprep.subr.bf16.mxu0 0
        %2132 = vmatpush1.bf16.msra.mxu0 %v2129
        %2133 = vmatprep.subr.bf16.mxu0 0
        %2134 = vmatpush1.bf16.msra.mxu0 0
        %2135 = vmatprep.subr.bf16.mxu0 0
        %2136 = vmatpush1.bf16.msra.mxu0 0
        %2137 = vmatprep.subr.bf16.mxu0 0
        %2138 = vmatpush1.bf16.msra.mxu0 0
        %2139 = vmatprep.subr.bf16.mxu0 0
        %2140 = vmatpush1.bf16.msra.mxu0 0
        %2141 = vmatprep.subr.bf16.mxu0 0
        %2142 = vmatpush1.bf16.msra.mxu0 0
        %2143 = vmatprep.subr.bf16.mxu0 0
        %2144 = vmatpush1.bf16.msra.mxu0 0
        %2145 = vmatprep.subr.bf16.mxu0 0
        %2146 = vmatpush1.bf16.msra.mxu0 0
        %2147 = vmatprep.subr.bf16.mxu0 0
        %2148 = vmatpush1.bf16.msra.mxu0 0
        %2149 = vmatprep.subr.bf16.mxu0 0
        %2150 = vmatpush1.bf16.msra.mxu0 0
        %2151 = vmatprep.subr.bf16.mxu0 0
        %2152 = vmatpush1.bf16.msra.mxu0 0
        %2153 = vmatprep.subr.bf16.mxu0 0
        %2154 = vmatpush1.bf16.msra.mxu0 0
        %2155 = vmatprep.subr.bf16.mxu0 0
        %2156 = vmatpush1.bf16.msra.mxu0 0
        %2157 = vmatprep.subr.bf16.mxu0 0
        %2158 = vmatpush1.bf16.msra.mxu0 0
        %2159 = vmatprep.subr.bf16.mxu0 0
        %2160 = vmatpush1.bf16.msra.mxu0 0
        %2161 = vmatprep.subr.bf16.mxu0 0
        %2162 = vmatpush1.bf16.msra.mxu0 0
        %2163 = vmatprep.mubr.bf16.mxu0 0
        %2164 = vmatmul.mubr.bf16.gmra.mrb[0].mxu0 %v2126
        %v2165 = vpop.f32.mrb[0].mxu0
        %v2166 = vadd.f32 0.0, %v2165
        %v2167 = vpop.f32.mrb[0].mxu0
        %v2168 = vpop.f32.mrb[0].mxu0
        %v2169 = vpop.f32.mrb[0].mxu0
        %2170 = vdwg.mxu0
        %v2171 = vsel %vm873, %v2028, 0.0
        %v2172 = vsel %vm873, %v2074, 0.0
        %v2173 = vadd.f32 %v2171, %v2172
        %v2174 = vsel %vm873, %v2120, 0.0
        %v2175 = vadd.f32 %v2173, %v2174
        %v2176 = vsel %vm873, %v2166, 0.0
        %v2177 = vadd.f32 %v2175, %v2176
        %v2178 = vld [vmem:[#allocation16] sm:$0x1]
        %v2180 = vlaneseq
        %v2181 = vshrl.u32 %v2180, 7
        %v2182 = vsub.s32 0, %v2181
        %v2183 = vrot.slane %v2178, %v2182
        %v2185 = vadd.f32 %v2177, %v2183
        %v2186 = vadd.f32 %v783, %v2185
        %v2187 = vld [vmem:[#allocation17] sm:$0x1]
        %v2188 = vld [vmem:[#allocation19] sm:$0x1]
        %v2189 = vsel %vm873, %v2186, 0.0
        %2190 = vadd.xlane.f32.xlu0 %v2189
        %v2191 = vpop.xlane.xlu0 %2190
        %v2192 = vrcp.pop 32.0
        %v2193 = vmul.f32 %v2191, %v2192
        %v2194 = vsub.f32 %v2186, %v2193
        %v2195 = vmul.f32 %v2194, %v2194
        %v2196 = vsel %vm873, %v2195, 0.0
        %2197 = vadd.xlane.f32.xlu0 %v2196
        %v2198 = vpop.xlane.xlu0 %2197
        %v2199 = vmul.f32 %v2198, %v2192
        %v2200 = vadd.f32 %v2199, 1e-05
        %v2201 = vrsqrt.pop %v2200
        %v2202 = vmul.f32 %v2194, %v2201
        %v2204 = vlaneseq
        %v2205 = vshrl.u32 %v2204, 7
        %v2206 = vsub.s32 0, %v2205
        %v2207 = vrot.slane %v2187, %v2206
        %v2209 = vmul.f32 %v2202, %v2207
        %v2211 = vlaneseq
        %v2212 = vshrl.u32 %v2211, 7
        %v2213 = vsub.s32 0, %v2212
        %v2214 = vrot.slane %v2188, %v2213
        %v2216 = vadd.f32 %v2209, %v2214
        %v2217 = vpack.c.bf16 %v2216, %v2216
        %v2218 = vld [vmem:[#allocation20] sm:$0xf]
        %v2219 = vld [vmem:[#allocation20 + $0x4] sm:$0xf]
        %v2220 = vld [vmem:[#allocation20 + $0x8] sm:$0xf]
        %v2221 = vld [vmem:[#allocation20 + $0xc] sm:$0xf]
        %v2222 = vld [vmem:[#allocation22] sm:$0x1]
        %v2224 = vlaneseq
        %v2225 = vshrl.u32 %v2224, 7
        %v2226 = vsub.s32 0, %v2225
        %v2227 = vrot.slane %v2222, %v2226
        %v2233 = vunpack.c.l.b16 %v2218
        %v2234 = vunpack.c.l.b16 %v2219
        %v2235 = vunpack.c.l.b16 %v2220
        %v2236 = vunpack.c.l.b16 %v2221
        %v2237 = vpack.c.b16 %v2234, %v2233
        %v2238 = vpack.c.b16 %v2236, %v2235
        %v2242 = vsel %vm873, %v2217, 0
        %2244 = vmatprep.subr.bf16.mxu0 0
        %2245 = vmatpush1.bf16.msra.mxu0 %v2237
        %2246 = vmatprep.subr.bf16.mxu0 0
        %2247 = vmatpush1.bf16.msra.mxu0 %v2238
        %2248 = vmatprep.subr.bf16.mxu0 0
        %2249 = vmatpush1.bf16.msra.mxu0 0
        %2250 = vmatprep.subr.bf16.mxu0 0
        %2251 = vmatpush1.bf16.msra.mxu0 0
        %2252 = vmatprep.subr.bf16.mxu0 0
        %2253 = vmatpush1.bf16.msra.mxu0 0
        %2254 = vmatprep.subr.bf16.mxu0 0
        %2255 = vmatpush1.bf16.msra.mxu0 0
        %2256 = vmatprep.subr.bf16.mxu0 0
        %2257 = vmatpush1.bf16.msra.mxu0 0
        %2258 = vmatprep.subr.bf16.mxu0 0
        %2259 = vmatpush1.bf16.msra.mxu0 0
        %2260 = vmatprep.subr.bf16.mxu0 0
        %2261 = vmatpush1.bf16.msra.mxu0 0
        %2262 = vmatprep.subr.bf16.mxu0 0
        %2263 = vmatpush1.bf16.msra.mxu0 0
        %2264 = vmatprep.subr.bf16.mxu0 0
        %2265 = vmatpush1.bf16.msra.mxu0 0
        %2266 = vmatprep.subr.bf16.mxu0 0
        %2267 = vmatpush1.bf16.msra.mxu0 0
        %2268 = vmatprep.subr.bf16.mxu0 0
        %2269 = vmatpush1.bf16.msra.mxu0 0
        %2270 = vmatprep.subr.bf16.mxu0 0
        %2271 = vmatpush1.bf16.msra.mxu0 0
        %2272 = vmatprep.subr.bf16.mxu0 0
        %2273 = vmatpush1.bf16.msra.mxu0 0
        %2274 = vmatprep.subr.bf16.mxu0 0
        %2275 = vmatpush1.bf16.msra.mxu0 0
        %2276 = vmatprep.mubr.bf16.mxu0 0
        %2277 = vmatmul.mubr.bf16.gmra.mrb[0].mxu0 %v2242
        %v2278 = vpop.f32.mrb[0].mxu0
        %v2279 = vadd.f32 %v2227, %v2278
        %v2280 = vpop.f32.mrb[0].mxu0
        %v2281 = vpop.f32.mrb[0].mxu0
        %v2282 = vpop.f32.mrb[0].mxu0
        %2283 = vdwg.mxu0
        %v2284 = vmax.f32 %v2279, 0.0
        %v2285 = vpack.c.bf16 %v2284, %v2284
        %v2286 = vld [vmem:[#allocation23] sm:$0xf]
        %v2287 = vld [vmem:[#allocation23 + $0x4] sm:$0xf]
        %v2288 = vld [vmem:[#allocation23 + $0x8] sm:$0xf]
        %v2289 = vld [vmem:[#allocation23 + $0xc] sm:$0xf]
        %v2290 = vld [vmem:[#allocation23 + $0x10] sm:$0xf]
        %v2291 = vld [vmem:[#allocation23 + $0x14] sm:$0xf]
        %v2292 = vld [vmem:[#allocation23 + $0x18] sm:$0xf]
        %v2293 = vld [vmem:[#allocation23 + $0x1c] sm:$0xf]
        %v2294 = vld [vmem:[#allocation25] sm:$0x1]
        %v2296 = vlaneseq
        %v2297 = vshrl.u32 %v2296, 7
        %v2298 = vsub.s32 0, %v2297
        %v2299 = vrot.slane %v2294, %v2298
        %v2309 = vunpack.c.l.b16 %v2286
        %v2310 = vunpack.c.l.b16 %v2287
        %v2311 = vunpack.c.l.b16 %v2288
        %v2312 = vunpack.c.l.b16 %v2289
        %v2313 = vunpack.c.l.b16 %v2290
        %v2314 = vunpack.c.l.b16 %v2291
        %v2315 = vunpack.c.l.b16 %v2292
        %v2316 = vunpack.c.l.b16 %v2293
        %v2317 = vpack.c.b16 %v2310, %v2309
        %v2318 = vpack.c.b16 %v2312, %v2311
        %v2319 = vpack.c.b16 %v2314, %v2313
        %v2320 = vpack.c.b16 %v2316, %v2315
        %vm2325 = vcmask 523264
        %v2327 = vsel %vm2325, %v2285, 0
        %2329 = vmatprep.subr.bf16.mxu0 0
        %2330 = vmatpush1.bf16.msra.mxu0 %v2317
        %2331 = vmatprep.subr.bf16.mxu0 0
        %2332 = vmatpush1.bf16.msra.mxu0 %v2318
        %2333 = vmatprep.subr.bf16.mxu0 0
        %2334 = vmatpush1.bf16.msra.mxu0 %v2319
        %2335 = vmatprep.subr.bf16.mxu0 0
        %2336 = vmatpush1.bf16.msra.mxu0 %v2320
        %2337 = vmatprep.subr.bf16.mxu0 0
        %2338 = vmatpush1.bf16.msra.mxu0 0
        %2339 = vmatprep.subr.bf16.mxu0 0
        %2340 = vmatpush1.bf16.msra.mxu0 0
        %2341 = vmatprep.subr.bf16.mxu0 0
        %2342 = vmatpush1.bf16.msra.mxu0 0
        %2343 = vmatprep.subr.bf16.mxu0 0
        %2344 = vmatpush1.bf16.msra.mxu0 0
        %2345 = vmatprep.subr.bf16.mxu0 0
        %2346 = vmatpush1.bf16.msra.mxu0 0
        %2347 = vmatprep.subr.bf16.mxu0 0
        %2348 = vmatpush1.bf16.msra.mxu0 0
        %2349 = vmatprep.subr.bf16.mxu0 0
        %2350 = vmatpush1.bf16.msra.mxu0 0
        %2351 = vmatprep.subr.bf16.mxu0 0
        %2352 = vmatpush1.bf16.msra.mxu0 0
        %2353 = vmatprep.subr.bf16.mxu0 0
        %2354 = vmatpush1.bf16.msra.mxu0 0
        %2355 = vmatprep.subr.bf16.mxu0 0
        %2356 = vmatpush1.bf16.msra.mxu0 0
        %2357 = vmatprep.subr.bf16.mxu0 0
        %2358 = vmatpush1.bf16.msra.mxu0 0
        %2359 = vmatprep.subr.bf16.mxu0 0
        %2360 = vmatpush1.bf16.msra.mxu0 0
        %2361 = vmatprep.mubr.bf16.mxu0 0
        %2362 = vmatmul.mubr.bf16.gmra.mrb[0].mxu0 %v2327
        %v2363 = vpop.f32.mrb[0].mxu0
        %v2364 = vadd.f32 %v2299, %v2363
        %v2365 = vpop.f32.mrb[0].mxu0
        %v2366 = vpop.f32.mrb[0].mxu0
        %v2367 = vpop.f32.mrb[0].mxu0
        %2368 = vdwg.mxu0
        %v2369 = vadd.f32 %v2216, %v2364
        %v2370 = vld [vmem:[#allocation26] sm:$0x1]
        %v2371 = vld [vmem:[#allocation28] sm:$0x1]
        %v2372 = vsel %vm873, %v2369, 0.0
        %2373 = vadd.xlane.f32.xlu0 %v2372
        %v2374 = vpop.xlane.xlu0 %2373
        %v2375 = vmul.f32 %v2374, %v2192
        %v2376 = vsub.f32 %v2369, %v2375
        %v2377 = vmul.f32 %v2376, %v2376
        %v2378 = vsel %vm873, %v2377, 0.0
        %2379 = vadd.xlane.f32.xlu0 %v2378
        %v2380 = vpop.xlane.xlu0 %2379
        %v2381 = vmul.f32 %v2380, %v2192
        %v2382 = vadd.f32 %v2381, 1e-05
        %v2383 = vrsqrt.pop %v2382
        %v2384 = vmul.f32 %v2376, %v2383
        %v2386 = vlaneseq
        %v2387 = vshrl.u32 %v2386, 7
        %v2388 = vsub.s32 0, %v2387
        %v2389 = vrot.slane %v2370, %v2388
        %v2391 = vmul.f32 %v2384, %v2389
        %v2393 = vlaneseq
        %v2394 = vshrl.u32 %v2393, 7
        %v2395 = vsub.s32 0, %v2394
        %v2396 = vrot.slane %v2371, %v2395
        %v2398 = vadd.f32 %v2391, %v2396
        %2399 = vst.msk [vmem:[%s781] sm:$0xff] %vm873, %v2398
        %s2400 = sand.u32 %s412, 1
        %s2401 = scalar_lea.sflag [#allocation4], %s2400
        %s2402 = sand.u32 %s412, 1
        %s2403 = smul.addr %s2402, 8
        %s2404 = scalar_lea.vmem [#allocation29], %s2403
        // Predicated region
        $region157: #{tpu_custom_call.1} parent=87 // pred_check
          %p2405 = pneg %p422
        $region158: #{tpu_custom_call.1} parent=87 // pred_check_branch
          %2407 = sbr.rel (%p2405) target = $region160
        $region159: #{tpu_custom_call.1} parent=87 // pred_region
          %s2409 = ssub.s32 128, 128
          %2410 = vsyncadd %s2401, %s2409
          %s2411 = smul.addr %s42, 128
          %s2412 = scalar_lea.hbm %s17, %s2411
          %s2414 = sshll.u32 %s2404, 4
          %s2415 = int_to_ptr.vmem [resolvable:$true] %s2414
          %2417 = dma.vmem_to_hbm [thread:$0]  %s2415, 128, %s2412, %s2401
        $region160: #{tpu_custom_call.1} parent=87 // pred_fallthru
          _
      $region88: #{tpu_custom_call.1} parent=5 // pred_fallthru
        _
      %p2418 = scmp.le.s32.totalorder 2, %s37
      // Predicated region
      $region161: #{tpu_custom_call.1} parent=5 // pred_check
        %p2419 = pneg %p2418
      $region162: #{tpu_custom_call.1} parent=5 // pred_check_branch
        %2421 = sbr.rel (%p2419) target = $region164
      $region163: #{tpu_custom_call.1} parent=5 // pred_region
        %s2422 = ssub.s32 %s37, 2
        // Predicated region
        $region165: #{tpu_custom_call.1} parent=163 // pred_check
          %p2423 = pneg %p428
        $region166: #{tpu_custom_call.1} parent=163 // pred_check_branch
          %2425 = sbr.rel (%p2423) target = $region168
        $region167: #{tpu_custom_call.1} parent=163 // pred_region
          %s2426 = sand.u32 %s413, 1
          %s2427 = scalar_lea.sflag [#allocation4], %s2426
          %s2428 = sand.u32 %s413, 1
          %s2429 = smul.addr %s2428, 8
          %s2430 = scalar_lea.vmem [#allocation29], %s2429
          %2431 = dma.done %s2427, 128
        $region168: #{tpu_custom_call.1} parent=163 // pred_fallthru
          _
      $region164: #{tpu_custom_call.1} parent=5 // pred_fallthru
        _
    $region6: #{tpu_custom_call.1} parent=1 // loop_footer
      %s41 = sadd.s32 1, %s37
    $region7: #{tpu_custom_call.1} parent=1 // loop_footer_branch
      %36 = sbr.rel target = $region3
    $region8: #{tpu_custom_call.1} parent=1 // loop_exit
      _
    %2432 = vsyncpa [#allocation3], 1
    %s2433 = scalar_lea.sflag [#allocation3], 1
    %2434 = vsyncpa %s2433, 1
    %2435 = vsyncpa [#allocation6], 1
    %2436 = vsyncpa [#allocation9], 1
    %2437 = vsyncpa [#allocation12], 1
    %2438 = vsyncpa [#allocation15], 1
    %2439 = vsyncpa [#allocation18], 1
    %2440 = vsyncpa [#allocation21], 1
    %2441 = vsyncpa [#allocation24], 1
    %2442 = vsyncpa [#allocation27], 1
    %2443 = vsyncpa [#allocation4], 1
    %s2444 = scalar_lea.sflag [#allocation4], 1
    %2445 = vsyncpa %s2444, 1

</llo_original>
